<compile_context>
chip_gen: v7x
topology: tpu7x:2x2x1
jax: 0.10.0
libtpu: 0.0.40
codegen_flags: <defaults>
</compile_context>

<pallas_src>
import jax
import jax.numpy as jnp
from jax.experimental import pallas as pl
from jax.experimental.pallas import tpu as pltpu


# ----------------------------- Pallas kernel -------------------------------
def detr_infer_kernel(patches_ref, w_emb_ref, b_emb_ref,
                      w_head_ref, b_head_ref, scale_ref, out_ref):
    """Fused detector heads + deploy postprocessor for one batch element.

    patches: [1, Q, P]  bf16 flattened image patches (one image per grid step)
    w_emb:   [P, D]     bf16 patch embedding
    w_head:  [D, L]     bf16 fused head: [cls (C) | pad | box (4)], L = 128k
    b_emb:   [1, D]     f32
    b_head:  [1, L]     f32 (-1e9 on padding lanes)
    scale:   [1, 1, L]  f32: 1.0 on score lanes, (w, h, w, h) on box lanes
    out:     [1, Q, L]  f32: sigmoid scores | scaled xyxy boxes (lane-dense)
    """
    x = patches_ref[0]                                      # [Q, P] bf16

    # backbone / embedding: 2D matmul on the MXU, f32 accumulation
    feat = jnp.dot(x, w_emb_ref[...],
                   preferred_element_type=jnp.float32) + b_emb_ref[...]
    feat = jnp.maximum(feat, 0.0)                           # ReLU, f32 (VPU)
    feat_bf = feat.astype(jnp.bfloat16)

    # fused classification + box head: one lane-dense MXU matmul
    logits = jnp.dot(feat_bf, w_head_ref[...],
                     preferred_element_type=jnp.float32) + b_head_ref[...]
    sig = jax.nn.sigmoid(logits)                            # [Q, L] (EUP exp)

    # deploy postprocessor:
    #   scores = sigmoid(cls_logits)            (lanes 0..L-5)
    #   boxes  = cxcywh -> xyxy, * (w,h,w,h)    (last 4 lanes)
    L = sig.shape[-1]
    cxcywh = sig[:, L - 4:]                                 # [Q, 4]
    cxcy = cxcywh[:, :2]
    wh = cxcywh[:, 2:]
    xyxy = jnp.concatenate([cxcy - 0.5 * wh, cxcy + 0.5 * wh], axis=-1)

    fused = jnp.concatenate([sig[:, :L - 4], xyxy], axis=-1)  # [Q, L]
    out_ref[0] = fused * scale_ref[0]                         # one unmasked store


# ------------------------------ JAX wrapper ---------------------------------
def rtdetr_infer(images_nchw, orig_target_sizes, params,
                 patch=8, num_top_queries=10):
    """images_nchw: [B, 3, H, W] float32; orig_target_sizes: [B, 2] (w, h)."""
    B, Cin, H, W = images_nchw.shape
    Q = (H // patch) * (W // patch)           # queries = patches
    P = Cin * patch * patch                   # flattened patch dim

    w_emb, b_emb, w_cls, b_cls, w_box, b_box = params
    D = w_emb.shape[1]
    C = w_cls.shape[1]

    # Fused head weight: [cls | zero-pad | box] along lanes, padded to 128k.
    # Padding lanes get bias -1e9 so sigmoid(pad) == 0 and top-k is unaffected.
    L = max(((C + 4 + 127) // 128) * 128, 128)
    pad_mid = L - 4 - C
    w_head = jnp.concatenate(
        [w_cls, jnp.zeros((D, pad_mid), w_cls.dtype), w_box], axis=1)
    b_head = jnp.concatenate(
        [b_cls, jnp.full((1, pad_mid), -1e9, b_cls.dtype), b_box], axis=1)

    # bf16 operands (f32 accumulation inside the kernel)
    img_bf = images_nchw.astype(jnp.bfloat16)
    # glue: patchify (NCHW -> [B, Q, P]) in bf16
    # TODO(synk): fuse the patchify rearrangement into the kernel's index_map
    # to avoid the extra HBM round-trip at real image sizes.
    x = img_bf.reshape(B, Cin, H // patch, patch, W // patch, patch)
    x = jnp.transpose(x, (0, 2, 4, 1, 3, 5)).reshape(B, Q, P)

    w_emb_bf = w_emb.astype(jnp.bfloat16)
    w_head_bf = w_head.astype(jnp.bfloat16)

    # glue: per-image lane-dense scale row: 1.0 on score lanes, (w,h,w,h) on
    # the 4 box lanes.
    size4 = jnp.tile(orig_target_sizes.astype(jnp.float32), (1, 2))   # [B, 4]
    scale = jnp.concatenate(
        [jnp.ones((B, L - 4), jnp.float32), size4], axis=1).reshape(B, 1, L)

    cost = pl.CostEstimate(
        flops=2 * B * Q * P * D + 2 * B * Q * D * L,
        transcendentals=B * Q * L,
        bytes_accessed=(B * Q * P * 2 + P * D * 2 + D * 4
                        + D * L * 2 + L * 4 + B * L * 4 + B * Q * L * 4),
    )

    out = pl.pallas_call(
        detr_infer_kernel,
        out_shape=jax.ShapeDtypeStruct((B, Q, L), jnp.float32),
        grid=(B,),
        in_specs=[
            pl.BlockSpec((1, Q, P), lambda b: (b, 0, 0)),   # patches
            pl.BlockSpec((P, D),    lambda b: (0, 0)),      # w_emb
            pl.BlockSpec((1, D),    lambda b: (0, 0)),      # b_emb
            pl.BlockSpec((D, L),    lambda b: (0, 0)),      # fused head weight
            pl.BlockSpec((1, L),    lambda b: (0, 0)),      # fused head bias
            pl.BlockSpec((1, 1, L), lambda b: (b, 0, 0)),   # per-image scale
        ],
        out_specs=pl.BlockSpec((1, Q, L), lambda b: (b, 0, 0)),
        compiler_params=pltpu.CompilerParams(
            dimension_semantics=("parallel",)),
        cost_estimate=cost,
    )(x, w_emb_bf, b_emb, w_head_bf, b_head, scale)

    scores = out[:, :, :C]                     # sigmoid class scores
    boxes = out[:, :, L - 4:]                  # xyxy in original-image coords

    # glue: top-k selection over (query, class) pairs, like RT-DETR deploy
    # postprocessor.  TODO(synk): no clean TPU Pallas sort/top-k primitive;
    # done with jax.lax.top_k outside the kernel.
    flat = scores.reshape(B, Q * C)
    topk_scores, idx = jax.lax.top_k(flat, num_top_queries)
    labels = idx % C
    q_idx = idx // C
    sel_boxes = jnp.take_along_axis(boxes, q_idx[..., None], axis=1)
    return labels, sel_boxes, topk_scores


def init_params(key, P, D, C):
    k1, k2, k3 = jax.random.split(key, 3)
    w_emb = jax.random.normal(k1, (P, D), jnp.float32) * 0.05
    b_emb = jnp.zeros((1, D), jnp.float32)
    w_cls = jax.random.normal(k2, (D, C), jnp.float32) * 0.05
    b_cls = jnp.zeros((1, C), jnp.float32)
    w_box = jax.random.normal(k3, (D, 4), jnp.float32) * 0.05
    b_box = jnp.zeros((1, 4), jnp.float32)
    return (w_emb, b_emb, w_cls, b_cls, w_box, b_box)


if __name__ == "__main__":
    key = jax.random.PRNGKey(0)
    k_img, k_par = jax.random.split(key)

    B, Cin, H, W = 2, 3, 32, 32
    patch = 8
    D, num_classes = 128, 80
    P = Cin * patch * patch

    images = jax.random.normal(k_img, (B, Cin, H, W), jnp.float32)   # NCHW
    orig_sizes = jnp.array([[640.0, 480.0], [512.0, 512.0]], jnp.float32)
    params = init_params(k_par, P, D, num_classes)

    labels, boxes, scores = jax.jit(
        lambda im, sz: rtdetr_infer(im, sz, params))(images, orig_sizes)
    jax.block_until_ready((labels, boxes, scores))

    assert labels.shape == (B, 10)
    assert boxes.shape == (B, 10, 4)
    assert scores.shape == (B, 10)
    print("KERNEL_OK")
</pallas_src>

<mosaic_0001>
module attributes {stable_mosaic.version = 11 : i64} {
  func.func @detr_infer_kernel(%arg0: i32, %arg1: memref<1x16x192xbf16, #tpu.memory_space<vmem>>, %arg2: memref<192x128xbf16, #tpu.memory_space<vmem>>, %arg3: memref<1x128xf32, #tpu.memory_space<vmem>>, %arg4: memref<128x128xbf16, #tpu.memory_space<vmem>>, %arg5: memref<1x128xf32, #tpu.memory_space<vmem>>, %arg6: memref<1x1x128xf32, #tpu.memory_space<vmem>>, %arg7: memref<1x16x128xf32, #tpu.memory_space<vmem>>) attributes {dimension_semantics = [#tpu.dimension_semantics<parallel>], iteration_bounds = array<i64: 2>, scalar_prefetch = 0 : i64, scratch_operands = 0 : i64, tpu.core_type = #tpu.core_type<tc>, window_params = [{transform_indices = @transform_0, window_bounds = array<i64: 1, 16, 192>}, {pipeline_mode = #tpu.pipeline_mode<synchronous>, transform_indices = @transform_1, window_bounds = array<i64: 192, 128>}, {pipeline_mode = #tpu.pipeline_mode<synchronous>, transform_indices = @transform_2, window_bounds = array<i64: 1, 128>}, {pipeline_mode = #tpu.pipeline_mode<synchronous>, transform_indices = @transform_3, window_bounds = array<i64: 128, 128>}, {pipeline_mode = #tpu.pipeline_mode<synchronous>, transform_indices = @transform_4, window_bounds = array<i64: 1, 128>}, {transform_indices = @transform_5, window_bounds = array<i64: 1, 1, 128>}, {transform_indices = @transform_6, window_bounds = array<i64: 1, 16, 128>}]} {
    %c0 = arith.constant 0 : index
    %c0_0 = arith.constant 0 : index
    %c0_1 = arith.constant 0 : index
    %0 = vector.load %arg1[%c0, %c0_0, %c0_1] : memref<1x16x192xbf16, #tpu.memory_space<vmem>>, vector<1x16x192xbf16>
    %1 = vector.shape_cast %0 : vector<1x16x192xbf16> to vector<16x192xbf16>
    %c0_2 = arith.constant 0 : index
    %c0_3 = arith.constant 0 : index
    %2 = vector.load %arg2[%c0_2, %c0_3] : memref<192x128xbf16, #tpu.memory_space<vmem>>, vector<192x128xbf16>
    %cst = arith.constant dense<0.000000e+00> : vector<16x128xf32>
    %3 = tpu.matmul %1, %2, %cst {dimension_numbers = #tpu.dot_dimension_numbers<[1], [0], [0], [1], [0, 0, 1, 1], [], []>} : vector<16x192xbf16>, vector<192x128xbf16>, vector<16x128xf32> -> vector<16x128xf32>
    %c0_4 = arith.constant 0 : index
    %c0_5 = arith.constant 0 : index
    %4 = vector.load %arg3[%c0_4, %c0_5] : memref<1x128xf32, #tpu.memory_space<vmem>>, vector<1x128xf32>
    %5 = vector.broadcast %4 : vector<1x128xf32> to vector<16x128xf32>
    %6 = arith.addf %3, %5 : vector<16x128xf32>
    %cst_6 = arith.constant 0.000000e+00 : f32
    %7 = vector.broadcast %cst_6 : f32 to vector<16x128xf32>
    %8 = arith.maximumf %6, %7 : vector<16x128xf32>
    %9 = arith.truncf %8 : vector<16x128xf32> to vector<16x128xbf16>
    %c0_7 = arith.constant 0 : index
    %c0_8 = arith.constant 0 : index
    %10 = vector.load %arg4[%c0_7, %c0_8] : memref<128x128xbf16, #tpu.memory_space<vmem>>, vector<128x128xbf16>
    %cst_9 = arith.constant dense<0.000000e+00> : vector<16x128xf32>
    %11 = tpu.matmul %9, %10, %cst_9 {dimension_numbers = #tpu.dot_dimension_numbers<[1], [0], [0], [1], [0, 0, 1, 1], [], []>} : vector<16x128xbf16>, vector<128x128xbf16>, vector<16x128xf32> -> vector<16x128xf32>
    %c0_10 = arith.constant 0 : index
    %c0_11 = arith.constant 0 : index
    %12 = vector.load %arg5[%c0_10, %c0_11] : memref<1x128xf32, #tpu.memory_space<vmem>>, vector<1x128xf32>
    %13 = vector.broadcast %12 : vector<1x128xf32> to vector<16x128xf32>
    %14 = arith.addf %11, %13 : vector<16x128xf32>
    %15 = arith.negf %14 : vector<16x128xf32>
    %16 = math.exp %15 : vector<16x128xf32>
    %cst_12 = arith.constant 1.000000e+00 : f32
    %17 = vector.broadcast %cst_12 : f32 to vector<16x128xf32>
    %18 = arith.addf %17, %16 : vector<16x128xf32>
    %19 = arith.divf %17, %18 : vector<16x128xf32>
    %20 = vector.extract_strided_slice %19 {offsets = [0, 124], sizes = [16, 4], strides = [1, 1]} : vector<16x128xf32> to vector<16x4xf32>
    %21 = vector.extract_strided_slice %20 {offsets = [0, 0], sizes = [16, 2], strides = [1, 1]} : vector<16x4xf32> to vector<16x2xf32>
    %22 = vector.extract_strided_slice %20 {offsets = [0, 2], sizes = [16, 2], strides = [1, 1]} : vector<16x4xf32> to vector<16x2xf32>
    %cst_13 = arith.constant 5.000000e-01 : f32
    %23 = vector.broadcast %cst_13 : f32 to vector<16x2xf32>
    %24 = arith.mulf %23, %22 : vector<16x2xf32>
    %25 = arith.subf %21, %24 : vector<16x2xf32>
    %cst_14 = arith.constant 5.000000e-01 : f32
    %26 = vector.broadcast %cst_14 : f32 to vector<16x2xf32>
    %27 = arith.mulf %26, %22 : vector<16x2xf32>
    %28 = arith.addf %21, %27 : vector<16x2xf32>
    %29 = tpu.concatenate %25, %28 in 1 : vector<16x2xf32>, vector<16x2xf32> -> vector<16x4xf32>
    %30 = vector.extract_strided_slice %19 {offsets = [0, 0], sizes = [16, 124], strides = [1, 1]} : vector<16x128xf32> to vector<16x124xf32>
    %31 = tpu.concatenate %30, %29 in 1 : vector<16x124xf32>, vector<16x4xf32> -> vector<16x128xf32>
    %c0_15 = arith.constant 0 : index
    %c0_16 = arith.constant 0 : index
    %c0_17 = arith.constant 0 : index
    %32 = vector.load %arg6[%c0_15, %c0_16, %c0_17] : memref<1x1x128xf32, #tpu.memory_space<vmem>>, vector<1x1x128xf32>
    %33 = vector.shape_cast %32 : vector<1x1x128xf32> to vector<1x128xf32>
    %34 = vector.broadcast %33 : vector<1x128xf32> to vector<16x128xf32>
    %35 = arith.mulf %31, %34 : vector<16x128xf32>
    %c0_18 = arith.constant 0 : index
    %c0_19 = arith.constant 0 : index
    %c0_20 = arith.constant 0 : index
    %36 = vector.load %arg7[%c0_18, %c0_19, %c0_20] : memref<1x16x128xf32, #tpu.memory_space<vmem>>, vector<1x16x128xf32>
    %37 = vector.shape_cast %36 : vector<1x16x128xf32> to vector<16x128xf32>
    %38 = vector.shape_cast %35 : vector<16x128xf32> to vector<1x16x128xf32>
    tpu.vector_store %arg7[%c0_18, %c0_19, %c0_20], %38 {strides = array<i32>} : memref<1x16x128xf32, #tpu.memory_space<vmem>>, vector<1x16x128xf32>,
    return
  }
  func.func @transform_0(%arg0: i32) -> (i32, i32, i32) {
    %c0_i32 = arith.constant 0 : i32
    %c0_i32_0 = arith.constant 0 : i32
    %c0_i32_1 = arith.constant 0 : i32
    return %arg0, %c0_i32, %c0_i32_0 : i32, i32, i32
  }
  func.func @transform_1(%arg0: i32) -> (i32, i32) {
    %c0_i32 = arith.constant 0 : i32
    %c0_i32_0 = arith.constant 0 : i32
    %c0_i32_1 = arith.constant 0 : i32
    return %c0_i32, %c0_i32_0 : i32, i32
  }
  func.func @transform_2(%arg0: i32) -> (i32, i32) {
    %c0_i32 = arith.constant 0 : i32
    %c0_i32_0 = arith.constant 0 : i32
    %c0_i32_1 = arith.constant 0 : i32
    return %c0_i32, %c0_i32_0 : i32, i32
  }
  func.func @transform_3(%arg0: i32) -> (i32, i32) {
    %c0_i32 = arith.constant 0 : i32
    %c0_i32_0 = arith.constant 0 : i32
    %c0_i32_1 = arith.constant 0 : i32
    return %c0_i32, %c0_i32_0 : i32, i32
  }
  func.func @transform_4(%arg0: i32) -> (i32, i32) {
    %c0_i32 = arith.constant 0 : i32
    %c0_i32_0 = arith.constant 0 : i32
    %c0_i32_1 = arith.constant 0 : i32
    return %c0_i32, %c0_i32_0 : i32, i32
  }
  func.func @transform_5(%arg0: i32) -> (i32, i32, i32) {
    %c0_i32 = arith.constant 0 : i32
    %c0_i32_0 = arith.constant 0 : i32
    %c0_i32_1 = arith.constant 0 : i32
    return %arg0, %c0_i32, %c0_i32_0 : i32, i32, i32
  }
  func.func @transform_6(%arg0: i32) -> (i32, i32, i32) {
    %c0_i32 = arith.constant 0 : i32
    %c0_i32_0 = arith.constant 0 : i32
    %c0_i32_1 = arith.constant 0 : i32
    return %arg0, %c0_i32, %c0_i32_0 : i32, i32, i32
  }
}

</mosaic_0001>

<llo_original>
// kernel: tile.9
$region0: #{tile.9}
  %s0 = inlined_call_operand.vmem [shape: f32[2,2,2], index: 0, kind: input, shape index: {}]
  %s1 = inlined_call_operand.vmem [shape: f32[2,4], index: 1, kind: output, shape index: {}]
  $region1: #{tile.9} parent=0
    #allocation0 [shape = 'u8[4096]{0}', space=vmem, size = 0x1000, scoped, tag = 'scoped mem for output reshape']
    #allocation1 [shape = 'u8[8192]{0}', space=vmem, size = 0x2000, scoped, tag = 'scoped mem for input reshape']
    %s3 = sshllo.u32 0, 2
    %s4 = scalar_lea.vmem %s0, 2
    %v5 = vld [vmem:[%s4] sm:%s3]
    %s6 = scalar_lea.vmem [#allocation1], 8
    %7 = vst [vmem:[%s6] sm:%s3] %v5
    %v8 = vld [vmem:[%s0] sm:%s3]
    %9 = vst [vmem:[#allocation1] sm:%s3] %v8
    %s10 = smov 3
    %v11 = vld [vmem:[#allocation1] ss:$8 sm:%s10]
    %vm12 = vcmask 15360
    %13 = vst.msk [vmem:[#allocation0] sm:$0x3] %vm12, %v11
    %s14 = scalar_lea.vmem [#allocation1], 1
    %s15 = smov 3
    %v16 = vld [vmem:[%s14] ss:$8 sm:%s15]
    %17 = vrot.lane.b32.xlu0 %v16, 2
    %v18 = vpop.permute.xlu0 %17
    %vm19 = vcmask 31760
    %20 = vst.msk [vmem:[#allocation0] sm:$0x3] %vm19, %v18
    %s22 = sshllo.u32 0, 2
    %v24 = vld [vmem:[#allocation0] sm:%s22]
    %s25 = sshllo.u32 0, 2
    %26 = vst [vmem:[%s1] sm:%s25] %v24

// kernel: custom-call
$region0: #{custom-call}
  #allocation0 [shape = 'u32[8,128]{1,0}', space=vmem, size = 0x1000, scoped, tag = 'scratch']
  #allocation1 [shape = 'u32[8,128]{1,0}', space=vmem, size = 0x1000, scoped, tag = 'scratch']
  #allocation2 [shape = 'u32[8,128]{1,0}', space=vmem, size = 0x1000, scoped, tag = 'scratch']
  #allocation3 [shape = 'u32[8,128]{1,0}', space=vmem, size = 0x1000, scoped, tag = 'scratch']
  #allocation4 [shape = 'u32[8,128]{1,0}', space=vmem, size = 0x1000, scoped, tag = 'scratch']
  #allocation5 [shape = 'u32[8,128]{1,0}', space=vmem, size = 0x1000, scoped, tag = 'scratch']
  #allocation6 [shape = 'u32[8,128]{1,0}', space=vmem, size = 0x1000, scoped, tag = 'scratch']
  %s0 = inlined_call_operand.vmem [shape: f32[2,1280], index: 0, kind: input, shape index: {}]
  %s1 = inlined_call_operand.hbm [shape: f32[2,10], index: 1, kind: output, shape index: {0}]
  %s2 = inlined_call_operand.vmem [shape: s32[2,10], index: 2, kind: output, shape index: {1}]
  %3 = xla_tuple %s1, %s2
  %4 = xla_tuple 2147483648, 2147483647
  $region1: #{custom-call} parent=0
    #allocation7 [shape = 'u8[4096]{0}', space=vmem, size = 0x1000, scoped, tag = 'operand span for operand 1']
    #allocation8 [shape = 'u8[1024]{0}', space=vmem, size = 0x400, scoped, tag = 'packed  for operand 1']
    #allocation9 [shape = 's32[1]{0}', space=sflag, size = 0x4, scoped, tag = 'scoped memory for custom-call']
    #allocation10 [shape = 'u8[4096]{0}', space=vmem, size = 0x1000, scoped, tag = 'operand span for operand 2']
    #allocation11 [shape = 'u8[1024]{0}', space=vmem, size = 0x400, scoped, tag = 'packed  for operand 2']
    #allocation12 [shape = 'f32[16,2]{1,0:T(8,128)}', space=vmem, size = 0x2000, scoped, tag = 'scoped memory for custom-call']
    #allocation13 [shape = 'f32[16,2]{1,0:T(8,128)}', space=vmem, size = 0x2000, scoped, tag = 'scoped memory for custom-call']
    #allocation14 [shape = 's32[16,2]{1,0:T(8,128)}', space=vmem, size = 0x2000, scoped, tag = 'scoped memory for custom-call']
    #allocation15 [shape = 's32[16,2]{1,0:T(8,128)}', space=vmem, size = 0x2000, scoped, tag = 'scoped memory for custom-call']
    %5 = vsyncpa [#allocation9], 0
    %6 = xla_tuple [#allocation7], [#allocation10]
    %7 = vst [vmem:[#allocation12] sm:$0xff] 2147483648
    %s8 = scalar_lea.vmem [#allocation12], 8
    %9 = vst [vmem:[%s8] sm:$0xff] 2147483648
    %10 = vst [vmem:[#allocation14] sm:$0xff] 2147483647
    %s11 = scalar_lea.vmem [#allocation14], 8
    %12 = vst [vmem:[%s11] sm:$0xff] 2147483647
    %13 = xla_tuple [#allocation12], [#allocation14]
    %14 = xla_tuple [#allocation13], [#allocation15]
    $region2: #{custom-call} parent=1
      #allocation16 [shape = 'u8[12288]{0}', space=vmem, size = 0x3000, scoped, tag = 'operand span for operand 0']
      #allocation17 [shape = 's32[3072]{0}', space=vmem, size = 0x3000, scoped, tag = 'scoped memory for custom-call']
      // Predicated region
      $region3: #{custom-call} parent=2 // pred_check
        _
      $region4: #{custom-call} parent=2 // pred_check_branch
        %16 = sbr.rel (0) target = $region6
      $region5: #{custom-call} parent=2 // pred_region
        // Predicated region
        $region7: #{custom-call} parent=5 // pred_check
          _
        $region8: #{custom-call} parent=5 // pred_check_branch
          %18 = sbr.rel (0) target = $region10
        $region9: #{custom-call} parent=5 // pred_region
          // Predicated region
          $region11: #{custom-call} parent=9 // pred_check
            _
          $region12: #{custom-call} parent=9 // pred_check_branch
            %20 = sbr.rel (0) target = $region14
          $region13: #{custom-call} parent=9 // pred_region
            %s21 = scalar_lea.vmem %s0, 16
            %s22 = scalar_lea.vmem [#allocation16], 16
            loop: start=0, step=1, limit=1
            $region15: #{custom-call} parent=13 // loop_pre_header
              _
            $region16: #{custom-call} parent=13 // loop_header
              %s24 = sphi 0, %s28
              %p25 = scmp.ge.s32.totalorder %s24, 1
              %s29 = sphi %s0, %s0
              %s30 = sphi [#allocation16], [#allocation16]
            $region17: #{custom-call} parent=13 // loop_header_branch
              %27 = sbr.rel (%p25) target = $region21
            $region18: #{custom-call} parent=13 // loop_body
              %v31 = vld [vmem:[%s29] sm:$0xff]
              %32 = vst [vmem:[%s30] sm:$0xff] %v31
              %v33 = vld [vmem:[%s29 + $0x8] sm:$0xff]
              %34 = vst [vmem:[%s30 + $0x8] sm:$0xff] %v33
            $region19: #{custom-call} parent=13 // loop_footer
              %s28 = sadd.s32 1, %s24
            $region20: #{custom-call} parent=13 // loop_footer_branch
              %23 = sbr.rel target = $region16
            $region21: #{custom-call} parent=13 // loop_exit
              _
            loop: start=0, step=1, limit=1
            $region22: #{custom-call} parent=13 // loop_pre_header
              _
            $region23: #{custom-call} parent=13 // loop_header
              %s37 = sphi 0, %s41
              %p38 = scmp.ge.s32.totalorder %s37, 1
              %s42 = sphi %s21, %s21
              %s43 = sphi %s22, %s22
            $region24: #{custom-call} parent=13 // loop_header_branch
              %40 = sbr.rel (%p38) target = $region28
            $region25: #{custom-call} parent=13 // loop_body
              %v44 = vld [vmem:[%s42] sm:$0xf]
              %45 = vst [vmem:[%s43] sm:$0xf] %v44
            $region26: #{custom-call} parent=13 // loop_footer
              %s41 = sadd.s32 1, %s37
            $region27: #{custom-call} parent=13 // loop_footer_branch
              %36 = sbr.rel target = $region23
            $region28: #{custom-call} parent=13 // loop_exit
              _
          $region14: #{custom-call} parent=9 // pred_fallthru
            _
        $region10: #{custom-call} parent=5 // pred_fallthru
          _
        %46 = vnop
      $region6: #{custom-call} parent=2 // pred_fallthru
        _
      // Predicated region
      $region29: #{custom-call} parent=2 // pred_check
        _
      $region30: #{custom-call} parent=2 // pred_check_branch
        %48 = sbr.rel (0) target = $region32
      $region31: #{custom-call} parent=2 // pred_region
        _
      $region32: #{custom-call} parent=2 // pred_fallthru
        _
      %v49 = vlaneseq
      %v50 = vand.u32 %v49, 127
      %v51 = vlaneseq
      %v52 = vshrl.u32 %v51, 7
      %v53 = vshrl.u32 %v52, 1
      %v54 = vand.u32 %v52, 1
      %v55 = vmul.u32 %v53, 128
      %v56 = vadd.s32 %v50, %v55
      %v58 = vld [vmem:[#allocation16] sm:$0xff]
      %vm59 = vcmp.lt.s32.totalorder %v58, 0
      %v60 = vsub.s32 2147483647, %v58
      %v61 = vsel %vm59, %v60, %v58
      %vm63 = vcmp.lt.s32.totalorder %v56, 1280
      %v64 = vsel %vm63, %v61, 2147483648
      %65 = vst [vmem:[#allocation16] sm:$0xff] %v64
      %s66 = scalar_lea.vmem [#allocation16], 8
      %v67 = vld [vmem:[%s66] sm:$0xff]
      %vm68 = vcmp.lt.s32.totalorder %v67, 0
      %v69 = vsub.s32 2147483647, %v67
      %v70 = vsel %vm68, %v69, %v67
      %v71 = vadd.s32 %v56, 512
      %vm72 = vcmp.lt.s32.totalorder %v71, 1280
      %v73 = vsel %vm72, %v70, 2147483648
      %74 = vst [vmem:[%s66] sm:$0xff] %v73
      %s75 = scalar_lea.vmem [#allocation16], 16
      %v76 = vld [vmem:[%s75] sm:$0xff]
      %vm77 = vcmp.lt.s32.totalorder %v76, 0
      %v78 = vsub.s32 2147483647, %v76
      %v79 = vsel %vm77, %v78, %v76
      %v80 = vadd.s32 %v56, 1024
      %vm81 = vcmp.lt.s32.totalorder %v80, 1280
      %v82 = vsel %vm81, %v79, 2147483648
      %83 = vst [vmem:[%s75] sm:$0xff] %v82
      %v84 = vlaneseq
      %v85 = vand.u32 %v84, 127
      %v86 = vlaneseq
      %v87 = vshrl.u32 %v86, 7
      %v88 = vshrl.u32 %v87, 1
      %v89 = vand.u32 %v87, 1
      %v90 = vmul.u32 %v88, 128
      %v91 = vadd.s32 %v85, %v90
      %94 = vst [vmem:[#allocation17] sm:$0xff] %v91
      %v95 = vadd.s32 %v91, 512
      %s96 = scalar_lea.vmem [#allocation17], 8
      %97 = vst [vmem:[%s96] sm:$0xff] %v95
      %v98 = vadd.s32 %v91, 1024
      %s99 = scalar_lea.vmem [#allocation17], 16
      %100 = vst [vmem:[%s99] sm:$0xff] %v98
      %101 = xla_tuple [#allocation16], [#allocation17]
      %102 = vst [vmem:[#allocation13] sm:$0xff] 2147483648
      %s103 = scalar_lea.vmem [#allocation13], 8
      %104 = vst [vmem:[%s103] sm:$0xff] 2147483648
      %105 = vst [vmem:[#allocation15] sm:$0xff] 2147483647
      %s106 = scalar_lea.vmem [#allocation15], 8
      %107 = vst [vmem:[%s106] sm:$0xff] 2147483647
      %108 = xla_tuple [#allocation13], [#allocation15]
      loop: start=0, step=1, limit=10
      $region33: #{custom-call} parent=2 // loop_pre_header
        _
      $region34: #{custom-call} parent=2 // loop_header
        %s110 = sphi 0, %s114
        %p111 = scmp.ge.s32.totalorder %s110, 10
      $region35: #{custom-call} parent=2 // loop_header_branch
        %113 = sbr.rel (%p111) target = $region39
      $region36: #{custom-call} parent=2 // loop_body
        %v115 = vld [vmem:[#allocation16] sm:$0xff]
        %v116 = vld [vmem:[#allocation17] sm:$0xff]
        %117 = xla_tuple %v115, %v116
        %s118 = scalar_lea.vmem [#allocation16], 8
        %v119 = vld [vmem:[%s118] sm:$0xff]
        %s120 = scalar_lea.vmem [#allocation17], 8
        %v121 = vld [vmem:[%s120] sm:$0xff]
        %122 = xla_tuple %v119, %v121
        %vm123 = vcmp.gt.s32.totalorder %v119, %v115
        %vm124 = vcmp.eq.s32.totalorder %v119, %v115
        %vm125 = vcmp.lt.s32.totalorder %v121, %v116
        %vm126 = vmand %vm124, %vm125
        %vm127 = vmor %vm123, %vm126
        %v128 = vsel %vm127, %v119, %v115
        %v129 = vsel %vm127, %v121, %v116
        %130 = xla_tuple %v128, %v129
        %s131 = scalar_lea.vmem [#allocation16], 16
        %v132 = vld [vmem:[%s131] sm:$0xff]
        %s133 = scalar_lea.vmem [#allocation17], 16
        %v134 = vld [vmem:[%s133] sm:$0xff]
        %135 = xla_tuple %v132, %v134
        %vm136 = vcmp.gt.s32.totalorder %v132, %v128
        %vm137 = vcmp.eq.s32.totalorder %v132, %v128
        %vm138 = vcmp.lt.s32.totalorder %v134, %v129
        %vm139 = vmand %vm137, %vm138
        %vm140 = vmor %vm136, %vm139
        %v141 = vsel %vm140, %v132, %v128
        %v142 = vsel %vm140, %v134, %v129
        %143 = xla_tuple %v141, %v142
        %v144 = vrot.slane %v141, 2
        %v145 = vrot.slane %v142, 2
        %146 = xla_tuple %v144, %v145
        %vm147 = vcmp.gt.s32.totalorder %v144, %v141
        %vm148 = vcmp.eq.s32.totalorder %v144, %v141
        %vm149 = vcmp.lt.s32.totalorder %v145, %v142
        %vm150 = vmand %vm148, %vm149
        %vm151 = vmor %vm147, %vm150
        %v152 = vsel %vm151, %v144, %v141
        %v153 = vsel %vm151, %v145, %v142
        %154 = xla_tuple %v152, %v153
        %v155 = vrot.slane %v152, 2
        %v156 = vrot.slane %v153, 2
        %157 = xla_tuple %v155, %v156
        %vm158 = vcmp.gt.s32.totalorder %v155, %v152
        %vm159 = vcmp.eq.s32.totalorder %v155, %v152
        %vm160 = vcmp.lt.s32.totalorder %v156, %v153
        %vm161 = vmand %vm159, %vm160
        %vm162 = vmor %vm158, %vm161
        %v163 = vsel %vm162, %v155, %v152
        %v164 = vsel %vm162, %v156, %v153
        %165 = xla_tuple %v163, %v164
        %v166 = vrot.slane %v163, 2
        %v167 = vrot.slane %v164, 2
        %168 = xla_tuple %v166, %v167
        %vm169 = vcmp.gt.s32.totalorder %v166, %v163
        %vm170 = vcmp.eq.s32.totalorder %v166, %v163
        %vm171 = vcmp.lt.s32.totalorder %v167, %v164
        %vm172 = vmand %vm170, %vm171
        %vm173 = vmor %vm169, %vm172
        %v174 = vsel %vm173, %v166, %v163
        %v175 = vsel %vm173, %v167, %v164
        %176 = xla_tuple %v174, %v175
        %177 = vxpose.xlu0.b32.start [1/16] %v174, 128
        %178 = vxpose.xlu0.b32.cont [2/16] %v174, 128
        %179 = vxpose.xlu0.b32.cont [3/16] %v174, 128
        %180 = vxpose.xlu0.b32.cont [4/16] %v174, 128
        %181 = vxpose.xlu0.b32.cont [5/16] %v174, 128
        %182 = vxpose.xlu0.b32.cont [6/16] %v174, 128
        %183 = vxpose.xlu0.b32.cont [7/16] %v174, 128
        %184 = vxpose.xlu0.b32.cont [8/16] %v174, 128
        %185 = vxpose.xlu0.b32.cont [9/16] %v174, 128
        %186 = vxpose.xlu0.b32.cont [10/16] %v174, 128
        %187 = vxpose.xlu0.b32.cont [11/16] %v174, 128
        %188 = vxpose.xlu0.b32.cont [12/16] %v174, 128
        %189 = vxpose.xlu0.b32.cont [13/16] %v174, 128
        %190 = vxpose.xlu0.b32.cont [14/16] %v174, 128
        %191 = vxpose.xlu0.b32.cont [15/16] %v174, 128
        %192 = vxpose.xlu0.b32.end [16/16] %v174, 128
        %v193 = vpop.trf.xlu0
        %v194 = vpop.trf.xlu0
        %v195 = vpop.trf.xlu0
        %v196 = vpop.trf.xlu0
        %v197 = vpop.trf.xlu0
        %v198 = vpop.trf.xlu0
        %v199 = vpop.trf.xlu0
        %v200 = vpop.trf.xlu0
        %v201 = vpop.trf.xlu0
        %v202 = vpop.trf.xlu0
        %v203 = vpop.trf.xlu0
        %v204 = vpop.trf.xlu0
        %v205 = vpop.trf.xlu0
        %v206 = vpop.trf.xlu0
        %v207 = vpop.trf.xlu0
        %v208 = vpop.trf.xlu0
        %209 = vxpose.xlu0.b32.start [1/16] %v175, 128
        %210 = vxpose.xlu0.b32.cont [2/16] %v175, 128
        %211 = vxpose.xlu0.b32.cont [3/16] %v175, 128
        %212 = vxpose.xlu0.b32.cont [4/16] %v175, 128
        %213 = vxpose.xlu0.b32.cont [5/16] %v175, 128
        %214 = vxpose.xlu0.b32.cont [6/16] %v175, 128
        %215 = vxpose.xlu0.b32.cont [7/16] %v175, 128
        %216 = vxpose.xlu0.b32.cont [8/16] %v175, 128
        %217 = vxpose.xlu0.b32.cont [9/16] %v175, 128
        %218 = vxpose.xlu0.b32.cont [10/16] %v175, 128
        %219 = vxpose.xlu0.b32.cont [11/16] %v175, 128
        %220 = vxpose.xlu0.b32.cont [12/16] %v175, 128
        %221 = vxpose.xlu0.b32.cont [13/16] %v175, 128
        %222 = vxpose.xlu0.b32.cont [14/16] %v175, 128
        %223 = vxpose.xlu0.b32.cont [15/16] %v175, 128
        %224 = vxpose.xlu0.b32.end [16/16] %v175, 128
        %v225 = vpop.trf.xlu0
        %v226 = vpop.trf.xlu0
        %v227 = vpop.trf.xlu0
        %v228 = vpop.trf.xlu0
        %v229 = vpop.trf.xlu0
        %v230 = vpop.trf.xlu0
        %v231 = vpop.trf.xlu0
        %v232 = vpop.trf.xlu0
        %v233 = vpop.trf.xlu0
        %v234 = vpop.trf.xlu0
        %v235 = vpop.trf.xlu0
        %v236 = vpop.trf.xlu0
        %v237 = vpop.trf.xlu0
        %v238 = vpop.trf.xlu0
        %v239 = vpop.trf.xlu0
        %v240 = vpop.trf.xlu0
        %241 = xla_tuple %v193, %v225
        %242 = xla_tuple %v194, %v226
        %vm243 = vcmp.gt.s32.totalorder %v194, %v193
        %vm244 = vcmp.eq.s32.totalorder %v194, %v193
        %vm245 = vcmp.lt.s32.totalorder %v226, %v225
        %vm246 = vmand %vm244, %vm245
        %vm247 = vmor %vm243, %vm246
        %v248 = vsel %vm247, %v194, %v193
        %v249 = vsel %vm247, %v226, %v225
        %250 = xla_tuple %v248, %v249
        %251 = xla_tuple %v195, %v227
        %vm252 = vcmp.gt.s32.totalorder %v195, %v248
        %vm253 = vcmp.eq.s32.totalorder %v195, %v248
        %vm254 = vcmp.lt.s32.totalorder %v227, %v249
        %vm255 = vmand %vm253, %vm254
        %vm256 = vmor %vm252, %vm255
        %v257 = vsel %vm256, %v195, %v248
        %v258 = vsel %vm256, %v227, %v249
        %259 = xla_tuple %v257, %v258
        %260 = xla_tuple %v196, %v228
        %vm261 = vcmp.gt.s32.totalorder %v196, %v257
        %vm262 = vcmp.eq.s32.totalorder %v196, %v257
        %vm263 = vcmp.lt.s32.totalorder %v228, %v258
        %vm264 = vmand %vm262, %vm263
        %vm265 = vmor %vm261, %vm264
        %v266 = vsel %vm265, %v196, %v257
        %v267 = vsel %vm265, %v228, %v258
        %268 = xla_tuple %v266, %v267
        %269 = xla_tuple %v197, %v229
        %vm270 = vcmp.gt.s32.totalorder %v197, %v266
        %vm271 = vcmp.eq.s32.totalorder %v197, %v266
        %vm272 = vcmp.lt.s32.totalorder %v229, %v267
        %vm273 = vmand %vm271, %vm272
        %vm274 = vmor %vm270, %vm273
        %v275 = vsel %vm274, %v197, %v266
        %v276 = vsel %vm274, %v229, %v267
        %277 = xla_tuple %v275, %v276
        %278 = xla_tuple %v198, %v230
        %vm279 = vcmp.gt.s32.totalorder %v198, %v275
        %vm280 = vcmp.eq.s32.totalorder %v198, %v275
        %vm281 = vcmp.lt.s32.totalorder %v230, %v276
        %vm282 = vmand %vm280, %vm281
        %vm283 = vmor %vm279, %vm282
        %v284 = vsel %vm283, %v198, %v275
        %v285 = vsel %vm283, %v230, %v276
        %286 = xla_tuple %v284, %v285
        %287 = xla_tuple %v199, %v231
        %vm288 = vcmp.gt.s32.totalorder %v199, %v284
        %vm289 = vcmp.eq.s32.totalorder %v199, %v284
        %vm290 = vcmp.lt.s32.totalorder %v231, %v285
        %vm291 = vmand %vm289, %vm290
        %vm292 = vmor %vm288, %vm291
        %v293 = vsel %vm292, %v199, %v284
        %v294 = vsel %vm292, %v231, %v285
        %295 = xla_tuple %v293, %v294
        %296 = xla_tuple %v200, %v232
        %vm297 = vcmp.gt.s32.totalorder %v200, %v293
        %vm298 = vcmp.eq.s32.totalorder %v200, %v293
        %vm299 = vcmp.lt.s32.totalorder %v232, %v294
        %vm300 = vmand %vm298, %vm299
        %vm301 = vmor %vm297, %vm300
        %v302 = vsel %vm301, %v200, %v293
        %v303 = vsel %vm301, %v232, %v294
        %304 = xla_tuple %v302, %v303
        %305 = xla_tuple %v201, %v233
        %vm306 = vcmp.gt.s32.totalorder %v201, %v302
        %vm307 = vcmp.eq.s32.totalorder %v201, %v302
        %vm308 = vcmp.lt.s32.totalorder %v233, %v303
        %vm309 = vmand %vm307, %vm308
        %vm310 = vmor %vm306, %vm309
        %v311 = vsel %vm310, %v201, %v302
        %v312 = vsel %vm310, %v233, %v303
        %313 = xla_tuple %v311, %v312
        %314 = xla_tuple %v202, %v234
        %vm315 = vcmp.gt.s32.totalorder %v202, %v311
        %vm316 = vcmp.eq.s32.totalorder %v202, %v311
        %vm317 = vcmp.lt.s32.totalorder %v234, %v312
        %vm318 = vmand %vm316, %vm317
        %vm319 = vmor %vm315, %vm318
        %v320 = vsel %vm319, %v202, %v311
        %v321 = vsel %vm319, %v234, %v312
        %322 = xla_tuple %v320, %v321
        %323 = xla_tuple %v203, %v235
        %vm324 = vcmp.gt.s32.totalorder %v203, %v320
        %vm325 = vcmp.eq.s32.totalorder %v203, %v320
        %vm326 = vcmp.lt.s32.totalorder %v235, %v321
        %vm327 = vmand %vm325, %vm326
        %vm328 = vmor %vm324, %vm327
        %v329 = vsel %vm328, %v203, %v320
        %v330 = vsel %vm328, %v235, %v321
        %331 = xla_tuple %v329, %v330
        %332 = xla_tuple %v204, %v236
        %vm333 = vcmp.gt.s32.totalorder %v204, %v329
        %vm334 = vcmp.eq.s32.totalorder %v204, %v329
        %vm335 = vcmp.lt.s32.totalorder %v236, %v330
        %vm336 = vmand %vm334, %vm335
        %vm337 = vmor %vm333, %vm336
        %v338 = vsel %vm337, %v204, %v329
        %v339 = vsel %vm337, %v236, %v330
        %340 = xla_tuple %v338, %v339
        %341 = xla_tuple %v205, %v237
        %vm342 = vcmp.gt.s32.totalorder %v205, %v338
        %vm343 = vcmp.eq.s32.totalorder %v205, %v338
        %vm344 = vcmp.lt.s32.totalorder %v237, %v339
        %vm345 = vmand %vm343, %vm344
        %vm346 = vmor %vm342, %vm345
        %v347 = vsel %vm346, %v205, %v338
        %v348 = vsel %vm346, %v237, %v339
        %349 = xla_tuple %v347, %v348
        %350 = xla_tuple %v206, %v238
        %vm351 = vcmp.gt.s32.totalorder %v206, %v347
        %vm352 = vcmp.eq.s32.totalorder %v206, %v347
        %vm353 = vcmp.lt.s32.totalorder %v238, %v348
        %vm354 = vmand %vm352, %vm353
        %vm355 = vmor %vm351, %vm354
        %v356 = vsel %vm355, %v206, %v347
        %v357 = vsel %vm355, %v238, %v348
        %358 = xla_tuple %v356, %v357
        %359 = xla_tuple %v207, %v239
        %vm360 = vcmp.gt.s32.totalorder %v207, %v356
        %vm361 = vcmp.eq.s32.totalorder %v207, %v356
        %vm362 = vcmp.lt.s32.totalorder %v239, %v357
        %vm363 = vmand %vm361, %vm362
        %vm364 = vmor %vm360, %vm363
        %v365 = vsel %vm364, %v207, %v356
        %v366 = vsel %vm364, %v239, %v357
        %367 = xla_tuple %v365, %v366
        %368 = xla_tuple %v208, %v240
        %vm369 = vcmp.gt.s32.totalorder %v208, %v365
        %vm370 = vcmp.eq.s32.totalorder %v208, %v365
        %vm371 = vcmp.lt.s32.totalorder %v240, %v366
        %vm372 = vmand %vm370, %vm371
        %vm373 = vmor %vm369, %vm372
        %v374 = vsel %vm373, %v208, %v365
        %v375 = vsel %vm373, %v240, %v366
        %376 = xla_tuple %v374, %v375
        %v377 = vrot.slane %v374, 1
        %v378 = vrot.slane %v375, 1
        %379 = xla_tuple %v377, %v378
        %vm380 = vcmp.gt.s32.totalorder %v377, %v374
        %vm381 = vcmp.eq.s32.totalorder %v377, %v374
        %vm382 = vcmp.lt.s32.totalorder %v378, %v375
        %vm383 = vmand %vm381, %vm382
        %vm384 = vmor %vm380, %vm383
        %v385 = vsel %vm384, %v377, %v374
        %v386 = vsel %vm384, %v378, %v375
        %387 = xla_tuple %v385, %v386
        %v388 = vrot.slane %v385, 1
        %v389 = vrot.slane %v386, 1
        %390 = xla_tuple %v388, %v389
        %vm391 = vcmp.gt.s32.totalorder %v388, %v385
        %vm392 = vcmp.eq.s32.totalorder %v388, %v385
        %vm393 = vcmp.lt.s32.totalorder %v389, %v386
        %vm394 = vmand %vm392, %vm393
        %vm395 = vmor %vm391, %vm394
        %v396 = vsel %vm395, %v388, %v385
        %v397 = vsel %vm395, %v389, %v386
        %398 = xla_tuple %v396, %v397
        %v399 = vrot.slane %v396, 1
        %v400 = vrot.slane %v397, 1
        %401 = xla_tuple %v399, %v400
        %vm402 = vcmp.gt.s32.totalorder %v399, %v396
        %vm403 = vcmp.eq.s32.totalorder %v399, %v396
        %vm404 = vcmp.lt.s32.totalorder %v400, %v397
        %vm405 = vmand %vm403, %vm404
        %vm406 = vmor %vm402, %vm405
        %v407 = vsel %vm406, %v399, %v396
        %v408 = vsel %vm406, %v400, %v397
        %409 = xla_tuple %v407, %v408
        %v410 = vrot.slane %v407, 1
        %v411 = vrot.slane %v408, 1
        %412 = xla_tuple %v410, %v411
        %vm413 = vcmp.gt.s32.totalorder %v410, %v407
        %vm414 = vcmp.eq.s32.totalorder %v410, %v407
        %vm415 = vcmp.lt.s32.totalorder %v411, %v408
        %vm416 = vmand %vm414, %vm415
        %vm417 = vmor %vm413, %vm416
        %v418 = vsel %vm417, %v410, %v407
        %v419 = vsel %vm417, %v411, %v408
        %420 = xla_tuple %v418, %v419
        %v421 = vrot.slane %v418, 1
        %v422 = vrot.slane %v419, 1
        %423 = xla_tuple %v421, %v422
        %vm424 = vcmp.gt.s32.totalorder %v421, %v418
        %vm425 = vcmp.eq.s32.totalorder %v421, %v418
        %vm426 = vcmp.lt.s32.totalorder %v422, %v419
        %vm427 = vmand %vm425, %vm426
        %vm428 = vmor %vm424, %vm427
        %v429 = vsel %vm428, %v421, %v418
        %v430 = vsel %vm428, %v422, %v419
        %431 = xla_tuple %v429, %v430
        %v432 = vrot.slane %v429, 1
        %v433 = vrot.slane %v430, 1
        %434 = xla_tuple %v432, %v433
        %vm435 = vcmp.gt.s32.totalorder %v432, %v429
        %vm436 = vcmp.eq.s32.totalorder %v432, %v429
        %vm437 = vcmp.lt.s32.totalorder %v433, %v430
        %vm438 = vmand %vm436, %vm437
        %vm439 = vmor %vm435, %vm438
        %v440 = vsel %vm439, %v432, %v429
        %v441 = vsel %vm439, %v433, %v430
        %442 = xla_tuple %v440, %v441
        %v443 = vrot.slane %v440, 1
        %v444 = vrot.slane %v441, 1
        %445 = xla_tuple %v443, %v444
        %vm446 = vcmp.gt.s32.totalorder %v443, %v440
        %vm447 = vcmp.eq.s32.totalorder %v443, %v440
        %vm448 = vcmp.lt.s32.totalorder %v444, %v441
        %vm449 = vmand %vm447, %vm448
        %vm450 = vmor %vm446, %vm449
        %v451 = vsel %vm450, %v443, %v440
        %v452 = vsel %vm450, %v444, %v441
        %453 = xla_tuple %v451, %v452
        %s454 = scalar_lea.vmem [#allocation13], %s110
        %455 = vst [vmem:[%s454] sm:$0x1] %v451
        %s456 = scalar_lea.vmem [#allocation15], %s110
        %457 = vst [vmem:[%s456] sm:$0x1] %v452
        %458 = xla_tuple %455, %457
        %459 = vxpose.xlu0.b32.start [1/16] %v452, 128
        %460 = vxpose.xlu0.b32.cont [2/16] 0.0, 128
        %461 = vxpose.xlu0.b32.cont [3/16] 0.0, 128
        %462 = vxpose.xlu0.b32.cont [4/16] 0.0, 128
        %463 = vxpose.xlu0.b32.cont [5/16] 0.0, 128
        %464 = vxpose.xlu0.b32.cont [6/16] 0.0, 128
        %465 = vxpose.xlu0.b32.cont [7/16] 0.0, 128
        %466 = vxpose.xlu0.b32.cont [8/16] 0.0, 128
        %467 = vxpose.xlu0.b32.cont [9/16] 0.0, 128
        %468 = vxpose.xlu0.b32.cont [10/16] 0.0, 128
        %469 = vxpose.xlu0.b32.cont [11/16] 0.0, 128
        %470 = vxpose.xlu0.b32.cont [12/16] 0.0, 128
        %471 = vxpose.xlu0.b32.cont [13/16] 0.0, 128
        %472 = vxpose.xlu0.b32.cont [14/16] 0.0, 128
        %473 = vxpose.xlu0.b32.cont [15/16] 0.0, 128
        %474 = vxpose.xlu0.b32.end [16/16] 0.0, 128
        %v475 = vpop.trf.xlu0
        %v476 = vpop.trf.xlu0
        %v477 = vpop.trf.xlu0
        %v478 = vpop.trf.xlu0
        %v479 = vpop.trf.xlu0
        %v480 = vpop.trf.xlu0
        %v481 = vpop.trf.xlu0
        %v482 = vpop.trf.xlu0
        %v483 = vpop.trf.xlu0
        %v484 = vpop.trf.xlu0
        %v485 = vpop.trf.xlu0
        %v486 = vpop.trf.xlu0
        %v487 = vpop.trf.xlu0
        %v488 = vpop.trf.xlu0
        %v489 = vpop.trf.xlu0
        %v490 = vpop.trf.xlu0
        %s491 = vtos %v475
        %s492 = sshrl.u32 %s491, 9
        %p493 = scmp.lt.s32.totalorder %s491, 0
        %s494 = ssub.s32 0, %s491
        %s495 = scalar_select %p493, %s494, %s491
        %s496 = sand.u32 %s495, 511
        %s497 = ssub.s32 0, %s496
        %s498 = scalar_select %p493, %s497, %s496
        %s499 = sshrl.u32 %s498, 7
        %s500 = smul.u32 %s499, 256
        %s501 = sand.u32 %s498, 127
        %s502 = sadd.s32 %s500, %s501
        %v503 = vlaneseq
        %v504 = vstv %s502
        %vm506 = vcmp.eq.s32.totalorder %v503, %v504
        %s507 = smul.addr %s492, 8
        %s508 = scalar_lea.vmem [#allocation16], %s507
        %509 = vst.msk [vmem:[%s508] sm:$0xff] %vm506, 2147483648
        %s510 = smul.addr %s492, 8
        %s511 = scalar_lea.vmem [#allocation17], %s510
        %512 = vst.msk [vmem:[%s511] sm:$0xff] %vm506, 2147483647
        %513 = xla_tuple %509, %512
        %v514 = vrot.slane %v475, 1
        %s515 = vtos %v514
        %s516 = sshrl.u32 %s515, 9
        %p517 = scmp.lt.s32.totalorder %s515, 0
        %s518 = ssub.s32 0, %s515
        %s519 = scalar_select %p517, %s518, %s515
        %s520 = sand.u32 %s519, 511
        %s521 = ssub.s32 0, %s520
        %s522 = scalar_select %p517, %s521, %s520
        %s523 = sshrl.u32 %s522, 7
        %s524 = smul.u32 %s523, 256
        %s525 = sand.u32 %s522, 127
        %s526 = sadd.s32 %s524, %s525
        %v527 = vlaneseq
        %v528 = vstv %s526
        %v529 = vadd.s32 %v528, 128
        %vm530 = vcmp.eq.s32.totalorder %v527, %v529
        %s531 = smul.addr %s516, 8
        %s532 = scalar_lea.vmem [#allocation16], %s531
        %533 = vst.msk [vmem:[%s532] sm:$0xff] %vm530, 2147483648
        %s534 = smul.addr %s516, 8
        %s535 = scalar_lea.vmem [#allocation17], %s534
        %536 = vst.msk [vmem:[%s535] sm:$0xff] %vm530, 2147483647
        %537 = xla_tuple %533, %536
        %v538 = vrot.slane %v514, 1
      $region37: #{custom-call} parent=2 // loop_footer
        %s114 = sadd.s32 1, %s110
      $region38: #{custom-call} parent=2 // loop_footer_branch
        %109 = sbr.rel target = $region34
      $region39: #{custom-call} parent=2 // loop_exit
        _
      %s539 = scalar_lea.vmem [#allocation13], 8
      %s540 = scalar_lea.vmem [#allocation13], 7
      %v541 = vld [vmem:[%s540] ss:$-1 sm:$0xff]
      %s542 = scalar_lea.vmem %s539, 7 [#allocation13]
      %v543 = vld [vmem:[%s542] ss:$-1 sm:$0xff]
      %544 = vst [vmem:[#allocation13] sm:$0xff] %v543
      %545 = vst [vmem:[%s539] sm:$0xff] %v541
      %s546 = scalar_lea.vmem [#allocation15], 8
      %s547 = scalar_lea.vmem [#allocation15], 7
      %v548 = vld [vmem:[%s547] ss:$-1 sm:$0xff]
      %s549 = scalar_lea.vmem %s546, 7 [#allocation15]
      %v550 = vld [vmem:[%s549] ss:$-1 sm:$0xff]
      %551 = vst [vmem:[#allocation15] sm:$0xff] %v550
      %552 = vst [vmem:[%s546] sm:$0xff] %v548
      %553 = xla_tuple %545, %552
      %v554 = vld [vmem:[#allocation12] sm:$0xff]
      %v555 = vld [vmem:[#allocation14] sm:$0xff]
      %556 = xla_tuple %v554, %v555
      %v557 = vld [vmem:[#allocation13] sm:$0xff]
      %v558 = vld [vmem:[#allocation15] sm:$0xff]
      %559 = xla_tuple %v557, %v558
      %vm560 = vcmp.gt.s32.totalorder %v554, %v557
      %vm561 = vcmp.eq.s32.totalorder %v554, %v557
      %vm562 = vcmp.lt.s32.totalorder %v555, %v558
      %vm563 = vmand %vm561, %vm562
      %vm564 = vmor %vm560, %vm563
      %v565 = vsel %vm564, %v554, %v557
      %566 = vst [vmem:[#allocation12] sm:$0xff] %v565
      %v567 = vsel %vm564, %v557, %v554
      %568 = vst [vmem:[#allocation13] sm:$0xff] %v567
      %v569 = vsel %vm564, %v555, %v558
      %570 = vst [vmem:[#allocation14] sm:$0xff] %v569
      %v571 = vsel %vm564, %v558, %v555
      %572 = vst [vmem:[#allocation15] sm:$0xff] %v571
      %573 = xla_tuple %568, %572
      %s574 = scalar_lea.vmem [#allocation12], 8
      %v575 = vld [vmem:[%s574] sm:$0xff]
      %s576 = scalar_lea.vmem [#allocation14], 8
      %v577 = vld [vmem:[%s576] sm:$0xff]
      %578 = xla_tuple %v575, %v577
      %s579 = scalar_lea.vmem [#allocation13], 8
      %v580 = vld [vmem:[%s579] sm:$0xff]
      %s581 = scalar_lea.vmem [#allocation15], 8
      %v582 = vld [vmem:[%s581] sm:$0xff]
      %583 = xla_tuple %v580, %v582
      %vm584 = vcmp.gt.s32.totalorder %v575, %v580
      %vm585 = vcmp.eq.s32.totalorder %v575, %v580
      %vm586 = vcmp.lt.s32.totalorder %v577, %v582
      %vm587 = vmand %vm585, %vm586
      %vm588 = vmor %vm584, %vm587
      %s589 = scalar_lea.vmem [#allocation12], 8
      %v590 = vsel %vm588, %v575, %v580
      %591 = vst [vmem:[%s589] sm:$0xff] %v590
      %s592 = scalar_lea.vmem [#allocation13], 8
      %v593 = vsel %vm588, %v580, %v575
      %594 = vst [vmem:[%s592] sm:$0xff] %v593
      %s595 = scalar_lea.vmem [#allocation14], 8
      %v596 = vsel %vm588, %v577, %v582
      %597 = vst [vmem:[%s595] sm:$0xff] %v596
      %s598 = scalar_lea.vmem [#allocation15], 8
      %v599 = vsel %vm588, %v582, %v577
      %600 = vst [vmem:[%s598] sm:$0xff] %v599
      %601 = xla_tuple %594, %600
      %s602 = scalar_lea.vmem [#allocation12], 8
      %s603 = scalar_lea.vmem [#allocation14], 8
      %604 = xla_tuple %s602, %s603
      %v605 = vld [vmem:[#allocation12] sm:$0xff]
      %v606 = vld [vmem:[#allocation14] sm:$0xff]
      %607 = xla_tuple %v605, %v606
      %v608 = vld [vmem:[%s602] sm:$0xff]
      %v609 = vld [vmem:[%s603] sm:$0xff]
      %610 = xla_tuple %v608, %v609
      %vm611 = vcmp.gt.s32.totalorder %v605, %v608
      %vm612 = vcmp.eq.s32.totalorder %v605, %v608
      %vm613 = vcmp.lt.s32.totalorder %v606, %v609
      %vm614 = vmand %vm612, %vm613
      %vm615 = vmor %vm611, %vm614
      %v616 = vsel %vm615, %v605, %v608
      %617 = vst [vmem:[#allocation12] sm:$0xff] %v616
      %v618 = vsel %vm615, %v608, %v605
      %619 = vst [vmem:[%s602] sm:$0xff] %v618
      %v620 = vsel %vm615, %v606, %v609
      %621 = vst [vmem:[#allocation14] sm:$0xff] %v620
      %v622 = vsel %vm615, %v609, %v606
      %623 = vst [vmem:[%s603] sm:$0xff] %v622
      %624 = xla_tuple %619, %623
      %625 = xla_tuple [#allocation12], [#allocation14]
      %v626 = vld [vmem:[#allocation12] sm:$0xff]
      %v627 = vld [vmem:[#allocation14] sm:$0xff]
      %628 = xla_tuple %v626, %v627
      %v630 = vunpack.c.l.s4 839939668
      %v631 = vunpack.c.0.s8 %v630
      %v632 = vlaneseq
      %v633 = vshrl.u32 %v632, 7
      %v634 = vsub.s32 %v631, %v633
      %v635 = vrot.slane %v626, %v634
      %v637 = vunpack.c.l.s4 839939668
      %v638 = vunpack.c.0.s8 %v637
      %v639 = vlaneseq
      %v640 = vshrl.u32 %v639, 7
      %v641 = vsub.s32 %v638, %v640
      %v642 = vrot.slane %v627, %v641
      %643 = xla_tuple %v635, %v642
      %vm644 = vcmp.gt.s32.totalorder %v626, %v635
      %vm645 = vcmp.eq.s32.totalorder %v626, %v635
      %vm646 = vcmp.lt.s32.totalorder %v627, %v642
      %vm647 = vmand %vm645, %vm646
      %vm648 = vmor %vm644, %vm647
      %v649 = vlaneseq
      %v650 = vshrl.u32 %v649, 7
      %v651 = vand.u32 %v650, 4
      %vm652 = vcmp.ne.s32.totalorder %v651, 0
      %vm653 = vmxor %vm648, %vm652
      %v654 = vsel %vm653, %v626, %v635
      %v655 = vsel %vm653, %v627, %v642
      %656 = xla_tuple %v654, %v655
      %v658 = vunpack.c.l.s4 1417023538
      %v659 = vunpack.c.0.s8 %v658
      %v660 = vlaneseq
      %v661 = vshrl.u32 %v660, 7
      %v662 = vsub.s32 %v659, %v661
      %v663 = vrot.slane %v654, %v662
      %v665 = vunpack.c.l.s4 1417023538
      %v666 = vunpack.c.0.s8 %v665
      %v667 = vlaneseq
      %v668 = vshrl.u32 %v667, 7
      %v669 = vsub.s32 %v666, %v668
      %v670 = vrot.slane %v655, %v669
      %671 = xla_tuple %v663, %v670
      %vm672 = vcmp.gt.s32.totalorder %v654, %v663
      %vm673 = vcmp.eq.s32.totalorder %v654, %v663
      %vm674 = vcmp.lt.s32.totalorder %v655, %v670
      %vm675 = vmand %vm673, %vm674
      %vm676 = vmor %vm672, %vm675
      %v677 = vlaneseq
      %v678 = vshrl.u32 %v677, 7
      %v679 = vand.u32 %v678, 2
      %vm680 = vcmp.ne.s32.totalorder %v679, 0
      %vm681 = vmxor %vm676, %vm680
      %v682 = vsel %vm681, %v654, %v663
      %v683 = vsel %vm681, %v655, %v670
      %684 = xla_tuple %v682, %v683
      %v686 = vunpack.c.l.s4 1732584193
      %v687 = vunpack.c.0.s8 %v686
      %v688 = vlaneseq
      %v689 = vshrl.u32 %v688, 7
      %v690 = vsub.s32 %v687, %v689
      %v691 = vrot.slane %v682, %v690
      %v693 = vunpack.c.l.s4 1732584193
      %v694 = vunpack.c.0.s8 %v693
      %v695 = vlaneseq
      %v696 = vshrl.u32 %v695, 7
      %v697 = vsub.s32 %v694, %v696
      %v698 = vrot.slane %v683, %v697
      %699 = xla_tuple %v691, %v698
      %vm700 = vcmp.gt.s32.totalorder %v682, %v691
      %vm701 = vcmp.eq.s32.totalorder %v682, %v691
      %vm702 = vcmp.lt.s32.totalorder %v683, %v698
      %vm703 = vmand %vm701, %vm702
      %vm704 = vmor %vm700, %vm703
      %v705 = vlaneseq
      %v706 = vshrl.u32 %v705, 7
      %v707 = vand.u32 %v706, 1
      %vm708 = vcmp.ne.s32.totalorder %v707, 0
      %vm709 = vmxor %vm704, %vm708
      %v710 = vsel %vm709, %v682, %v691
      %v711 = vsel %vm709, %v683, %v698
      %712 = xla_tuple %v710, %v711
      %713 = vst [vmem:[#allocation12] sm:$0xff] %v710
      %714 = vst [vmem:[#allocation14] sm:$0xff] %v711
      %715 = xla_tuple %713, %714
      %v716 = vld [vmem:[#allocation12] sm:$0xff]
      %v717 = vld [vmem:[#allocation14] sm:$0xff]
      %718 = xla_tuple %v716, %v717
      %v720 = vunpack.c.l.s4 839939668
      %v721 = vunpack.c.0.s8 %v720
      %v722 = vlaneseq
      %v723 = vshrl.u32 %v722, 7
      %v724 = vsub.s32 %v721, %v723
      %v725 = vrot.slane %v716, %v724
      %v727 = vunpack.c.l.s4 839939668
      %v728 = vunpack.c.0.s8 %v727
      %v729 = vlaneseq
      %v730 = vshrl.u32 %v729, 7
      %v731 = vsub.s32 %v728, %v730
      %v732 = vrot.slane %v717, %v731
      %733 = xla_tuple %v725, %v732
      %vm734 = vcmp.gt.s32.totalorder %v716, %v725
      %vm735 = vcmp.eq.s32.totalorder %v716, %v725
      %vm736 = vcmp.lt.s32.totalorder %v717, %v732
      %vm737 = vmand %vm735, %vm736
      %vm738 = vmor %vm734, %vm737
      %v739 = vlaneseq
      %v740 = vshrl.u32 %v739, 7
      %v741 = vand.u32 %v740, 4
      %vm742 = vcmp.ne.s32.totalorder %v741, 0
      %vm743 = vmxor %vm738, %vm742
      %v744 = vsel %vm743, %v716, %v725
      %v745 = vsel %vm743, %v717, %v732
      %746 = xla_tuple %v744, %v745
      %v748 = vunpack.c.l.s4 1417023538
      %v749 = vunpack.c.0.s8 %v748
      %v750 = vlaneseq
      %v751 = vshrl.u32 %v750, 7
      %v752 = vsub.s32 %v749, %v751
      %v753 = vrot.slane %v744, %v752
      %v755 = vunpack.c.l.s4 1417023538
      %v756 = vunpack.c.0.s8 %v755
      %v757 = vlaneseq
      %v758 = vshrl.u32 %v757, 7
      %v759 = vsub.s32 %v756, %v758
      %v760 = vrot.slane %v745, %v759
      %761 = xla_tuple %v753, %v760
      %vm762 = vcmp.gt.s32.totalorder %v744, %v753
      %vm763 = vcmp.eq.s32.totalorder %v744, %v753
      %vm764 = vcmp.lt.s32.totalorder %v745, %v760
      %vm765 = vmand %vm763, %vm764
      %vm766 = vmor %vm762, %vm765
      %v767 = vlaneseq
      %v768 = vshrl.u32 %v767, 7
      %v769 = vand.u32 %v768, 2
      %vm770 = vcmp.ne.s32.totalorder %v769, 0
      %vm771 = vmxor %vm766, %vm770
      %v772 = vsel %vm771, %v744, %v753
      %v773 = vsel %vm771, %v745, %v760
      %774 = xla_tuple %v772, %v773
      %v776 = vunpack.c.l.s4 1732584193
      %v777 = vunpack.c.0.s8 %v776
      %v778 = vlaneseq
      %v779 = vshrl.u32 %v778, 7
      %v780 = vsub.s32 %v777, %v779
      %v781 = vrot.slane %v772, %v780
      %v783 = vunpack.c.l.s4 1732584193
      %v784 = vunpack.c.0.s8 %v783
      %v785 = vlaneseq
      %v786 = vshrl.u32 %v785, 7
      %v787 = vsub.s32 %v784, %v786
      %v788 = vrot.slane %v773, %v787
      %789 = xla_tuple %v781, %v788
      %vm790 = vcmp.gt.s32.totalorder %v772, %v781
      %vm791 = vcmp.eq.s32.totalorder %v772, %v781
      %vm792 = vcmp.lt.s32.totalorder %v773, %v788
      %vm793 = vmand %vm791, %vm792
      %vm794 = vmor %vm790, %vm793
      %v795 = vlaneseq
      %v796 = vshrl.u32 %v795, 7
      %v797 = vand.u32 %v796, 1
      %vm798 = vcmp.ne.s32.totalorder %v797, 0
      %vm799 = vmxor %vm794, %vm798
      %v800 = vsel %vm799, %v772, %v781
      %v801 = vsel %vm799, %v773, %v788
      %802 = xla_tuple %v800, %v801
      %803 = vst [vmem:[#allocation12] sm:$0xff] %v800
      %804 = vst [vmem:[#allocation14] sm:$0xff] %v801
      %805 = xla_tuple %803, %804
      %806 = xla_tuple %s602, %s603
      %v807 = vld [vmem:[%s602] sm:$0xff]
      %v808 = vld [vmem:[%s603] sm:$0xff]
      %809 = xla_tuple %v807, %v808
      %v811 = vunpack.c.l.s4 839939668
      %v812 = vunpack.c.0.s8 %v811
      %v813 = vlaneseq
      %v814 = vshrl.u32 %v813, 7
      %v815 = vsub.s32 %v812, %v814
      %v816 = vrot.slane %v807, %v815
      %v818 = vunpack.c.l.s4 839939668
      %v819 = vunpack.c.0.s8 %v818
      %v820 = vlaneseq
      %v821 = vshrl.u32 %v820, 7
      %v822 = vsub.s32 %v819, %v821
      %v823 = vrot.slane %v808, %v822
      %824 = xla_tuple %v816, %v823
      %vm825 = vcmp.gt.s32.totalorder %v807, %v816
      %vm826 = vcmp.eq.s32.totalorder %v807, %v816
      %vm827 = vcmp.lt.s32.totalorder %v808, %v823
      %vm828 = vmand %vm826, %vm827
      %vm829 = vmor %vm825, %vm828
      %v830 = vlaneseq
      %v831 = vshrl.u32 %v830, 7
      %v832 = vand.u32 %v831, 4
      %vm833 = vcmp.ne.s32.totalorder %v832, 0
      %vm834 = vmxor %vm829, %vm833
      %v835 = vsel %vm834, %v807, %v816
      %v836 = vsel %vm834, %v808, %v823
      %837 = xla_tuple %v835, %v836
      %v839 = vunpack.c.l.s4 1417023538
      %v840 = vunpack.c.0.s8 %v839
      %v841 = vlaneseq
      %v842 = vshrl.u32 %v841, 7
      %v843 = vsub.s32 %v840, %v842
      %v844 = vrot.slane %v835, %v843
      %v846 = vunpack.c.l.s4 1417023538
      %v847 = vunpack.c.0.s8 %v846
      %v848 = vlaneseq
      %v849 = vshrl.u32 %v848, 7
      %v850 = vsub.s32 %v847, %v849
      %v851 = vrot.slane %v836, %v850
      %852 = xla_tuple %v844, %v851
      %vm853 = vcmp.gt.s32.totalorder %v835, %v844
      %vm854 = vcmp.eq.s32.totalorder %v835, %v844
      %vm855 = vcmp.lt.s32.totalorder %v836, %v851
      %vm856 = vmand %vm854, %vm855
      %vm857 = vmor %vm853, %vm856
      %v858 = vlaneseq
      %v859 = vshrl.u32 %v858, 7
      %v860 = vand.u32 %v859, 2
      %vm861 = vcmp.ne.s32.totalorder %v860, 0
      %vm862 = vmxor %vm857, %vm861
      %v863 = vsel %vm862, %v835, %v844
      %v864 = vsel %vm862, %v836, %v851
      %865 = xla_tuple %v863, %v864
      %v867 = vunpack.c.l.s4 1732584193
      %v868 = vunpack.c.0.s8 %v867
      %v869 = vlaneseq
      %v870 = vshrl.u32 %v869, 7
      %v871 = vsub.s32 %v868, %v870
      %v872 = vrot.slane %v863, %v871
      %v874 = vunpack.c.l.s4 1732584193
      %v875 = vunpack.c.0.s8 %v874
      %v876 = vlaneseq
      %v877 = vshrl.u32 %v876, 7
      %v878 = vsub.s32 %v875, %v877
      %v879 = vrot.slane %v864, %v878
      %880 = xla_tuple %v872, %v879
      %vm881 = vcmp.gt.s32.totalorder %v863, %v872
      %vm882 = vcmp.eq.s32.totalorder %v863, %v872
      %vm883 = vcmp.lt.s32.totalorder %v864, %v879
      %vm884 = vmand %vm882, %vm883
      %vm885 = vmor %vm881, %vm884
      %v886 = vlaneseq
      %v887 = vshrl.u32 %v886, 7
      %v888 = vand.u32 %v887, 1
      %vm889 = vcmp.ne.s32.totalorder %v888, 0
      %vm890 = vmxor %vm885, %vm889
      %v891 = vsel %vm890, %v863, %v872
      %v892 = vsel %vm890, %v864, %v879
      %893 = xla_tuple %v891, %v892
      %894 = vst [vmem:[%s602] sm:$0xff] %v891
      %895 = vst [vmem:[%s603] sm:$0xff] %v892
      %896 = xla_tuple %894, %895
      %v897 = vld [vmem:[%s602] sm:$0xff]
      %v898 = vld [vmem:[%s603] sm:$0xff]
      %899 = xla_tuple %v897, %v898
      %v901 = vunpack.c.l.s4 839939668
      %v902 = vunpack.c.0.s8 %v901
      %v903 = vlaneseq
      %v904 = vshrl.u32 %v903, 7
      %v905 = vsub.s32 %v902, %v904
      %v906 = vrot.slane %v897, %v905
      %v908 = vunpack.c.l.s4 839939668
      %v909 = vunpack.c.0.s8 %v908
      %v910 = vlaneseq
      %v911 = vshrl.u32 %v910, 7
      %v912 = vsub.s32 %v909, %v911
      %v913 = vrot.slane %v898, %v912
      %914 = xla_tuple %v906, %v913
      %vm915 = vcmp.gt.s32.totalorder %v897, %v906
      %vm916 = vcmp.eq.s32.totalorder %v897, %v906
      %vm917 = vcmp.lt.s32.totalorder %v898, %v913
      %vm918 = vmand %vm916, %vm917
      %vm919 = vmor %vm915, %vm918
      %v920 = vlaneseq
      %v921 = vshrl.u32 %v920, 7
      %v922 = vand.u32 %v921, 4
      %vm923 = vcmp.ne.s32.totalorder %v922, 0
      %vm924 = vmxor %vm919, %vm923
      %v925 = vsel %vm924, %v897, %v906
      %v926 = vsel %vm924, %v898, %v913
      %927 = xla_tuple %v925, %v926
      %v929 = vunpack.c.l.s4 1417023538
      %v930 = vunpack.c.0.s8 %v929
      %v931 = vlaneseq
      %v932 = vshrl.u32 %v931, 7
      %v933 = vsub.s32 %v930, %v932
      %v934 = vrot.slane %v925, %v933
      %v936 = vunpack.c.l.s4 1417023538
      %v937 = vunpack.c.0.s8 %v936
      %v938 = vlaneseq
      %v939 = vshrl.u32 %v938, 7
      %v940 = vsub.s32 %v937, %v939
      %v941 = vrot.slane %v926, %v940
      %942 = xla_tuple %v934, %v941
      %vm943 = vcmp.gt.s32.totalorder %v925, %v934
      %vm944 = vcmp.eq.s32.totalorder %v925, %v934
      %vm945 = vcmp.lt.s32.totalorder %v926, %v941
      %vm946 = vmand %vm944, %vm945
      %vm947 = vmor %vm943, %vm946
      %v948 = vlaneseq
      %v949 = vshrl.u32 %v948, 7
      %v950 = vand.u32 %v949, 2
      %vm951 = vcmp.ne.s32.totalorder %v950, 0
      %vm952 = vmxor %vm947, %vm951
      %v953 = vsel %vm952, %v925, %v934
      %v954 = vsel %vm952, %v926, %v941
      %955 = xla_tuple %v953, %v954
      %v957 = vunpack.c.l.s4 1732584193
      %v958 = vunpack.c.0.s8 %v957
      %v959 = vlaneseq
      %v960 = vshrl.u32 %v959, 7
      %v961 = vsub.s32 %v958, %v960
      %v962 = vrot.slane %v953, %v961
      %v964 = vunpack.c.l.s4 1732584193
      %v965 = vunpack.c.0.s8 %v964
      %v966 = vlaneseq
      %v967 = vshrl.u32 %v966, 7
      %v968 = vsub.s32 %v965, %v967
      %v969 = vrot.slane %v954, %v968
      %970 = xla_tuple %v962, %v969
      %vm971 = vcmp.gt.s32.totalorder %v953, %v962
      %vm972 = vcmp.eq.s32.totalorder %v953, %v962
      %vm973 = vcmp.lt.s32.totalorder %v954, %v969
      %vm974 = vmand %vm972, %vm973
      %vm975 = vmor %vm971, %vm974
      %v976 = vlaneseq
      %v977 = vshrl.u32 %v976, 7
      %v978 = vand.u32 %v977, 1
      %vm979 = vcmp.ne.s32.totalorder %v978, 0
      %vm980 = vmxor %vm975, %vm979
      %v981 = vsel %vm980, %v953, %v962
      %v982 = vsel %vm980, %v954, %v969
      %983 = xla_tuple %v981, %v982
      %984 = vst [vmem:[%s602] sm:$0xff] %v981
      %985 = vst [vmem:[%s603] sm:$0xff] %v982
      %986 = xla_tuple %984, %985
      %s987 = scalar_lea.vmem [#allocation13], 8
      %s988 = scalar_lea.vmem [#allocation15], 8
      %989 = xla_tuple %s987, %s988
      %v990 = vld [vmem:[#allocation13] sm:$0xff]
      %v991 = vld [vmem:[#allocation15] sm:$0xff]
      %992 = xla_tuple %v990, %v991
      %v993 = vld [vmem:[%s987] sm:$0xff]
      %v994 = vld [vmem:[%s988] sm:$0xff]
      %995 = xla_tuple %v993, %v994
      %vm996 = vcmp.gt.s32.totalorder %v990, %v993
      %vm997 = vcmp.eq.s32.totalorder %v990, %v993
      %vm998 = vcmp.lt.s32.totalorder %v991, %v994
      %vm999 = vmand %vm997, %vm998
      %vm1000 = vmor %vm996, %vm999
      %v1001 = vsel %vm1000, %v990, %v993
      %1002 = vst [vmem:[#allocation13] sm:$0xff] %v1001
      %v1003 = vsel %vm1000, %v993, %v990
      %1004 = vst [vmem:[%s987] sm:$0xff] %v1003
      %v1005 = vsel %vm1000, %v991, %v994
      %1006 = vst [vmem:[#allocation15] sm:$0xff] %v1005
      %v1007 = vsel %vm1000, %v994, %v991
      %1008 = vst [vmem:[%s988] sm:$0xff] %v1007
      %1009 = xla_tuple %1004, %1008
      %1010 = xla_tuple [#allocation13], [#allocation15]
      %v1011 = vld [vmem:[#allocation13] sm:$0xff]
      %v1012 = vld [vmem:[#allocation15] sm:$0xff]
      %1013 = xla_tuple %v1011, %v1012
      %v1015 = vunpack.c.l.s4 839939668
      %v1016 = vunpack.c.0.s8 %v1015
      %v1017 = vlaneseq
      %v1018 = vshrl.u32 %v1017, 7
      %v1019 = vsub.s32 %v1016, %v1018
      %v1020 = vrot.slane %v1011, %v1019
      %v1022 = vunpack.c.l.s4 839939668
      %v1023 = vunpack.c.0.s8 %v1022
      %v1024 = vlaneseq
      %v1025 = vshrl.u32 %v1024, 7
      %v1026 = vsub.s32 %v1023, %v1025
      %v1027 = vrot.slane %v1012, %v1026
      %1028 = xla_tuple %v1020, %v1027
      %vm1029 = vcmp.gt.s32.totalorder %v1011, %v1020
      %vm1030 = vcmp.eq.s32.totalorder %v1011, %v1020
      %vm1031 = vcmp.lt.s32.totalorder %v1012, %v1027
      %vm1032 = vmand %vm1030, %vm1031
      %vm1033 = vmor %vm1029, %vm1032
      %v1034 = vlaneseq
      %v1035 = vshrl.u32 %v1034, 7
      %v1036 = vand.u32 %v1035, 4
      %vm1037 = vcmp.ne.s32.totalorder %v1036, 0
      %vm1038 = vmxor %vm1033, %vm1037
      %v1039 = vsel %vm1038, %v1011, %v1020
      %v1040 = vsel %vm1038, %v1012, %v1027
      %1041 = xla_tuple %v1039, %v1040
      %v1043 = vunpack.c.l.s4 1417023538
      %v1044 = vunpack.c.0.s8 %v1043
      %v1045 = vlaneseq
      %v1046 = vshrl.u32 %v1045, 7
      %v1047 = vsub.s32 %v1044, %v1046
      %v1048 = vrot.slane %v1039, %v1047
      %v1050 = vunpack.c.l.s4 1417023538
      %v1051 = vunpack.c.0.s8 %v1050
      %v1052 = vlaneseq
      %v1053 = vshrl.u32 %v1052, 7
      %v1054 = vsub.s32 %v1051, %v1053
      %v1055 = vrot.slane %v1040, %v1054
      %1056 = xla_tuple %v1048, %v1055
      %vm1057 = vcmp.gt.s32.totalorder %v1039, %v1048
      %vm1058 = vcmp.eq.s32.totalorder %v1039, %v1048
      %vm1059 = vcmp.lt.s32.totalorder %v1040, %v1055
      %vm1060 = vmand %vm1058, %vm1059
      %vm1061 = vmor %vm1057, %vm1060
      %v1062 = vlaneseq
      %v1063 = vshrl.u32 %v1062, 7
      %v1064 = vand.u32 %v1063, 2
      %vm1065 = vcmp.ne.s32.totalorder %v1064, 0
      %vm1066 = vmxor %vm1061, %vm1065
      %v1067 = vsel %vm1066, %v1039, %v1048
      %v1068 = vsel %vm1066, %v1040, %v1055
      %1069 = xla_tuple %v1067, %v1068
      %v1071 = vunpack.c.l.s4 1732584193
      %v1072 = vunpack.c.0.s8 %v1071
      %v1073 = vlaneseq
      %v1074 = vshrl.u32 %v1073, 7
      %v1075 = vsub.s32 %v1072, %v1074
      %v1076 = vrot.slane %v1067, %v1075
      %v1078 = vunpack.c.l.s4 1732584193
      %v1079 = vunpack.c.0.s8 %v1078
      %v1080 = vlaneseq
      %v1081 = vshrl.u32 %v1080, 7
      %v1082 = vsub.s32 %v1079, %v1081
      %v1083 = vrot.slane %v1068, %v1082
      %1084 = xla_tuple %v1076, %v1083
      %vm1085 = vcmp.gt.s32.totalorder %v1067, %v1076
      %vm1086 = vcmp.eq.s32.totalorder %v1067, %v1076
      %vm1087 = vcmp.lt.s32.totalorder %v1068, %v1083
      %vm1088 = vmand %vm1086, %vm1087
      %vm1089 = vmor %vm1085, %vm1088
      %v1090 = vlaneseq
      %v1091 = vshrl.u32 %v1090, 7
      %v1092 = vand.u32 %v1091, 1
      %vm1093 = vcmp.ne.s32.totalorder %v1092, 0
      %vm1094 = vmxor %vm1089, %vm1093
      %v1095 = vsel %vm1094, %v1067, %v1076
      %v1096 = vsel %vm1094, %v1068, %v1083
      %1097 = xla_tuple %v1095, %v1096
      %1098 = vst [vmem:[#allocation13] sm:$0xff] %v1095
      %1099 = vst [vmem:[#allocation15] sm:$0xff] %v1096
      %1100 = xla_tuple %1098, %1099
      %v1101 = vld [vmem:[#allocation13] sm:$0xff]
      %v1102 = vld [vmem:[#allocation15] sm:$0xff]
      %1103 = xla_tuple %v1101, %v1102
      %v1105 = vunpack.c.l.s4 839939668
      %v1106 = vunpack.c.0.s8 %v1105
      %v1107 = vlaneseq
      %v1108 = vshrl.u32 %v1107, 7
      %v1109 = vsub.s32 %v1106, %v1108
      %v1110 = vrot.slane %v1101, %v1109
      %v1112 = vunpack.c.l.s4 839939668
      %v1113 = vunpack.c.0.s8 %v1112
      %v1114 = vlaneseq
      %v1115 = vshrl.u32 %v1114, 7
      %v1116 = vsub.s32 %v1113, %v1115
      %v1117 = vrot.slane %v1102, %v1116
      %1118 = xla_tuple %v1110, %v1117
      %vm1119 = vcmp.gt.s32.totalorder %v1101, %v1110
      %vm1120 = vcmp.eq.s32.totalorder %v1101, %v1110
      %vm1121 = vcmp.lt.s32.totalorder %v1102, %v1117
      %vm1122 = vmand %vm1120, %vm1121
      %vm1123 = vmor %vm1119, %vm1122
      %v1124 = vlaneseq
      %v1125 = vshrl.u32 %v1124, 7
      %v1126 = vand.u32 %v1125, 4
      %vm1127 = vcmp.ne.s32.totalorder %v1126, 0
      %vm1128 = vmxor %vm1123, %vm1127
      %v1129 = vsel %vm1128, %v1101, %v1110
      %v1130 = vsel %vm1128, %v1102, %v1117
      %1131 = xla_tuple %v1129, %v1130
      %v1133 = vunpack.c.l.s4 1417023538
      %v1134 = vunpack.c.0.s8 %v1133
      %v1135 = vlaneseq
      %v1136 = vshrl.u32 %v1135, 7
      %v1137 = vsub.s32 %v1134, %v1136
      %v1138 = vrot.slane %v1129, %v1137
      %v1140 = vunpack.c.l.s4 1417023538
      %v1141 = vunpack.c.0.s8 %v1140
      %v1142 = vlaneseq
      %v1143 = vshrl.u32 %v1142, 7
      %v1144 = vsub.s32 %v1141, %v1143
      %v1145 = vrot.slane %v1130, %v1144
      %1146 = xla_tuple %v1138, %v1145
      %vm1147 = vcmp.gt.s32.totalorder %v1129, %v1138
      %vm1148 = vcmp.eq.s32.totalorder %v1129, %v1138
      %vm1149 = vcmp.lt.s32.totalorder %v1130, %v1145
      %vm1150 = vmand %vm1148, %vm1149
      %vm1151 = vmor %vm1147, %vm1150
      %v1152 = vlaneseq
      %v1153 = vshrl.u32 %v1152, 7
      %v1154 = vand.u32 %v1153, 2
      %vm1155 = vcmp.ne.s32.totalorder %v1154, 0
      %vm1156 = vmxor %vm1151, %vm1155
      %v1157 = vsel %vm1156, %v1129, %v1138
      %v1158 = vsel %vm1156, %v1130, %v1145
      %1159 = xla_tuple %v1157, %v1158
      %v1161 = vunpack.c.l.s4 1732584193
      %v1162 = vunpack.c.0.s8 %v1161
      %v1163 = vlaneseq
      %v1164 = vshrl.u32 %v1163, 7
      %v1165 = vsub.s32 %v1162, %v1164
      %v1166 = vrot.slane %v1157, %v1165
      %v1168 = vunpack.c.l.s4 1732584193
      %v1169 = vunpack.c.0.s8 %v1168
      %v1170 = vlaneseq
      %v1171 = vshrl.u32 %v1170, 7
      %v1172 = vsub.s32 %v1169, %v1171
      %v1173 = vrot.slane %v1158, %v1172
      %1174 = xla_tuple %v1166, %v1173
      %vm1175 = vcmp.gt.s32.totalorder %v1157, %v1166
      %vm1176 = vcmp.eq.s32.totalorder %v1157, %v1166
      %vm1177 = vcmp.lt.s32.totalorder %v1158, %v1173
      %vm1178 = vmand %vm1176, %vm1177
      %vm1179 = vmor %vm1175, %vm1178
      %v1180 = vlaneseq
      %v1181 = vshrl.u32 %v1180, 7
      %v1182 = vand.u32 %v1181, 1
      %vm1183 = vcmp.ne.s32.totalorder %v1182, 0
      %vm1184 = vmxor %vm1179, %vm1183
      %v1185 = vsel %vm1184, %v1157, %v1166
      %v1186 = vsel %vm1184, %v1158, %v1173
      %1187 = xla_tuple %v1185, %v1186
      %1188 = vst [vmem:[#allocation13] sm:$0xff] %v1185
      %1189 = vst [vmem:[#allocation15] sm:$0xff] %v1186
      %1190 = xla_tuple %1188, %1189
      %1191 = xla_tuple %s987, %s988
      %v1192 = vld [vmem:[%s987] sm:$0xff]
      %v1193 = vld [vmem:[%s988] sm:$0xff]
      %1194 = xla_tuple %v1192, %v1193
      %v1196 = vunpack.c.l.s4 839939668
      %v1197 = vunpack.c.0.s8 %v1196
      %v1198 = vlaneseq
      %v1199 = vshrl.u32 %v1198, 7
      %v1200 = vsub.s32 %v1197, %v1199
      %v1201 = vrot.slane %v1192, %v1200
      %v1203 = vunpack.c.l.s4 839939668
      %v1204 = vunpack.c.0.s8 %v1203
      %v1205 = vlaneseq
      %v1206 = vshrl.u32 %v1205, 7
      %v1207 = vsub.s32 %v1204, %v1206
      %v1208 = vrot.slane %v1193, %v1207
      %1209 = xla_tuple %v1201, %v1208
      %vm1210 = vcmp.gt.s32.totalorder %v1192, %v1201
      %vm1211 = vcmp.eq.s32.totalorder %v1192, %v1201
      %vm1212 = vcmp.lt.s32.totalorder %v1193, %v1208
      %vm1213 = vmand %vm1211, %vm1212
      %vm1214 = vmor %vm1210, %vm1213
      %v1215 = vlaneseq
      %v1216 = vshrl.u32 %v1215, 7
      %v1217 = vand.u32 %v1216, 4
      %vm1218 = vcmp.ne.s32.totalorder %v1217, 0
      %vm1219 = vmxor %vm1214, %vm1218
      %v1220 = vsel %vm1219, %v1192, %v1201
      %v1221 = vsel %vm1219, %v1193, %v1208
      %1222 = xla_tuple %v1220, %v1221
      %v1224 = vunpack.c.l.s4 1417023538
      %v1225 = vunpack.c.0.s8 %v1224
      %v1226 = vlaneseq
      %v1227 = vshrl.u32 %v1226, 7
      %v1228 = vsub.s32 %v1225, %v1227
      %v1229 = vrot.slane %v1220, %v1228
      %v1231 = vunpack.c.l.s4 1417023538
      %v1232 = vunpack.c.0.s8 %v1231
      %v1233 = vlaneseq
      %v1234 = vshrl.u32 %v1233, 7
      %v1235 = vsub.s32 %v1232, %v1234
      %v1236 = vrot.slane %v1221, %v1235
      %1237 = xla_tuple %v1229, %v1236
      %vm1238 = vcmp.gt.s32.totalorder %v1220, %v1229
      %vm1239 = vcmp.eq.s32.totalorder %v1220, %v1229
      %vm1240 = vcmp.lt.s32.totalorder %v1221, %v1236
      %vm1241 = vmand %vm1239, %vm1240
      %vm1242 = vmor %vm1238, %vm1241
      %v1243 = vlaneseq
      %v1244 = vshrl.u32 %v1243, 7
      %v1245 = vand.u32 %v1244, 2
      %vm1246 = vcmp.ne.s32.totalorder %v1245, 0
      %vm1247 = vmxor %vm1242, %vm1246
      %v1248 = vsel %vm1247, %v1220, %v1229
      %v1249 = vsel %vm1247, %v1221, %v1236
      %1250 = xla_tuple %v1248, %v1249
      %v1252 = vunpack.c.l.s4 1732584193
      %v1253 = vunpack.c.0.s8 %v1252
      %v1254 = vlaneseq
      %v1255 = vshrl.u32 %v1254, 7
      %v1256 = vsub.s32 %v1253, %v1255
      %v1257 = vrot.slane %v1248, %v1256
      %v1259 = vunpack.c.l.s4 1732584193
      %v1260 = vunpack.c.0.s8 %v1259
      %v1261 = vlaneseq
      %v1262 = vshrl.u32 %v1261, 7
      %v1263 = vsub.s32 %v1260, %v1262
      %v1264 = vrot.slane %v1249, %v1263
      %1265 = xla_tuple %v1257, %v1264
      %vm1266 = vcmp.gt.s32.totalorder %v1248, %v1257
      %vm1267 = vcmp.eq.s32.totalorder %v1248, %v1257
      %vm1268 = vcmp.lt.s32.totalorder %v1249, %v1264
      %vm1269 = vmand %vm1267, %vm1268
      %vm1270 = vmor %vm1266, %vm1269
      %v1271 = vlaneseq
      %v1272 = vshrl.u32 %v1271, 7
      %v1273 = vand.u32 %v1272, 1
      %vm1274 = vcmp.ne.s32.totalorder %v1273, 0
      %vm1275 = vmxor %vm1270, %vm1274
      %v1276 = vsel %vm1275, %v1248, %v1257
      %v1277 = vsel %vm1275, %v1249, %v1264
      %1278 = xla_tuple %v1276, %v1277
      %1279 = vst [vmem:[%s987] sm:$0xff] %v1276
      %1280 = vst [vmem:[%s988] sm:$0xff] %v1277
      %1281 = xla_tuple %1279, %1280
      %v1282 = vld [vmem:[%s987] sm:$0xff]
      %v1283 = vld [vmem:[%s988] sm:$0xff]
      %1284 = xla_tuple %v1282, %v1283
      %v1286 = vunpack.c.l.s4 839939668
      %v1287 = vunpack.c.0.s8 %v1286
      %v1288 = vlaneseq
      %v1289 = vshrl.u32 %v1288, 7
      %v1290 = vsub.s32 %v1287, %v1289
      %v1291 = vrot.slane %v1282, %v1290
      %v1293 = vunpack.c.l.s4 839939668
      %v1294 = vunpack.c.0.s8 %v1293
      %v1295 = vlaneseq
      %v1296 = vshrl.u32 %v1295, 7
      %v1297 = vsub.s32 %v1294, %v1296
      %v1298 = vrot.slane %v1283, %v1297
      %1299 = xla_tuple %v1291, %v1298
      %vm1300 = vcmp.gt.s32.totalorder %v1282, %v1291
      %vm1301 = vcmp.eq.s32.totalorder %v1282, %v1291
      %vm1302 = vcmp.lt.s32.totalorder %v1283, %v1298
      %vm1303 = vmand %vm1301, %vm1302
      %vm1304 = vmor %vm1300, %vm1303
      %v1305 = vlaneseq
      %v1306 = vshrl.u32 %v1305, 7
      %v1307 = vand.u32 %v1306, 4
      %vm1308 = vcmp.ne.s32.totalorder %v1307, 0
      %vm1309 = vmxor %vm1304, %vm1308
      %v1310 = vsel %vm1309, %v1282, %v1291
      %v1311 = vsel %vm1309, %v1283, %v1298
      %1312 = xla_tuple %v1310, %v1311
      %v1314 = vunpack.c.l.s4 1417023538
      %v1315 = vunpack.c.0.s8 %v1314
      %v1316 = vlaneseq
      %v1317 = vshrl.u32 %v1316, 7
      %v1318 = vsub.s32 %v1315, %v1317
      %v1319 = vrot.slane %v1310, %v1318
      %v1321 = vunpack.c.l.s4 1417023538
      %v1322 = vunpack.c.0.s8 %v1321
      %v1323 = vlaneseq
      %v1324 = vshrl.u32 %v1323, 7
      %v1325 = vsub.s32 %v1322, %v1324
      %v1326 = vrot.slane %v1311, %v1325
      %1327 = xla_tuple %v1319, %v1326
      %vm1328 = vcmp.gt.s32.totalorder %v1310, %v1319
      %vm1329 = vcmp.eq.s32.totalorder %v1310, %v1319
      %vm1330 = vcmp.lt.s32.totalorder %v1311, %v1326
      %vm1331 = vmand %vm1329, %vm1330
      %vm1332 = vmor %vm1328, %vm1331
      %v1333 = vlaneseq
      %v1334 = vshrl.u32 %v1333, 7
      %v1335 = vand.u32 %v1334, 2
      %vm1336 = vcmp.ne.s32.totalorder %v1335, 0
      %vm1337 = vmxor %vm1332, %vm1336
      %v1338 = vsel %vm1337, %v1310, %v1319
      %v1339 = vsel %vm1337, %v1311, %v1326
      %1340 = xla_tuple %v1338, %v1339
      %v1342 = vunpack.c.l.s4 1732584193
      %v1343 = vunpack.c.0.s8 %v1342
      %v1344 = vlaneseq
      %v1345 = vshrl.u32 %v1344, 7
      %v1346 = vsub.s32 %v1343, %v1345
      %v1347 = vrot.slane %v1338, %v1346
      %v1349 = vunpack.c.l.s4 1732584193
      %v1350 = vunpack.c.0.s8 %v1349
      %v1351 = vlaneseq
      %v1352 = vshrl.u32 %v1351, 7
      %v1353 = vsub.s32 %v1350, %v1352
      %v1354 = vrot.slane %v1339, %v1353
      %1355 = xla_tuple %v1347, %v1354
      %vm1356 = vcmp.gt.s32.totalorder %v1338, %v1347
      %vm1357 = vcmp.eq.s32.totalorder %v1338, %v1347
      %vm1358 = vcmp.lt.s32.totalorder %v1339, %v1354
      %vm1359 = vmand %vm1357, %vm1358
      %vm1360 = vmor %vm1356, %vm1359
      %v1361 = vlaneseq
      %v1362 = vshrl.u32 %v1361, 7
      %v1363 = vand.u32 %v1362, 1
      %vm1364 = vcmp.ne.s32.totalorder %v1363, 0
      %vm1365 = vmxor %vm1360, %vm1364
      %v1366 = vsel %vm1365, %v1338, %v1347
      %v1367 = vsel %vm1365, %v1339, %v1354
      %1368 = xla_tuple %v1366, %v1367
      %1369 = vst [vmem:[%s987] sm:$0xff] %v1366
      %1370 = vst [vmem:[%s988] sm:$0xff] %v1367
      %1371 = xla_tuple %1369, %1370
    %v1372 = vld [vmem:[#allocation12] sm:$0xff]
    %vm1373 = vcmp.lt.s32.totalorder %v1372, 0
    %v1374 = vsub.s32 2147483647, %v1372
    %v1375 = vsel %vm1373, %v1374, %v1372
    %1376 = vst [vmem:[#allocation12] sm:$0xff] %v1375
    %s1377 = scalar_lea.vmem [#allocation12], 8
    %v1378 = vld [vmem:[%s1377] sm:$0xff]
    %vm1379 = vcmp.lt.s32.totalorder %v1378, 0
    %v1380 = vsub.s32 2147483647, %v1378
    %v1381 = vsel %vm1379, %v1380, %v1378
    %1382 = vst [vmem:[%s1377] sm:$0xff] %v1381
    %v1383 = vld [vmem:[#allocation12] sm:$0xff]
    %s1384 = scalar_lea.vmem [#allocation12], 8
    %v1385 = vld [vmem:[%s1384] sm:$0xff]
    %1386 = vxpose.xlu0.b32.start [1/2] (short) %v1383, 128
    %1387 = vxpose.xlu0.b32.end [2/2] (short) %v1385, 128
    %v1388 = vpop.trf.xlu0
    %v1389 = vpop.trf.xlu0
    %v1390 = vpop.trf.xlu0
    %v1391 = vpop.trf.xlu0
    %v1392 = vpop.trf.xlu0
    %v1393 = vpop.trf.xlu0
    %v1394 = vpop.trf.xlu0
    %v1395 = vpop.trf.xlu0
    %v1396 = vpop.trf.xlu0
    %v1397 = vpop.trf.xlu0
    %v1398 = vpop.trf.xlu0
    %v1399 = vpop.trf.xlu0
    %v1400 = vpop.trf.xlu0
    %v1401 = vpop.trf.xlu0
    %v1402 = vpop.trf.xlu0
    %v1403 = vpop.trf.xlu0
    %1404 = vst [vmem:[#allocation7] sm:$0xff] %v1388
    %v1405 = vld [vmem:[#allocation14] sm:$0xff]
    %s1406 = scalar_lea.vmem [#allocation14], 8
    %v1407 = vld [vmem:[%s1406] sm:$0xff]
    %1408 = vxpose.xlu0.b32.start [1/2] (short) %v1405, 128
    %1409 = vxpose.xlu0.b32.end [2/2] (short) %v1407, 128
    %v1410 = vpop.trf.xlu0
    %v1411 = vpop.trf.xlu0
    %v1412 = vpop.trf.xlu0
    %v1413 = vpop.trf.xlu0
    %v1414 = vpop.trf.xlu0
    %v1415 = vpop.trf.xlu0
    %v1416 = vpop.trf.xlu0
    %v1417 = vpop.trf.xlu0
    %v1418 = vpop.trf.xlu0
    %v1419 = vpop.trf.xlu0
    %v1420 = vpop.trf.xlu0
    %v1421 = vpop.trf.xlu0
    %v1422 = vpop.trf.xlu0
    %v1423 = vpop.trf.xlu0
    %v1424 = vpop.trf.xlu0
    %v1425 = vpop.trf.xlu0
    %1426 = vst [vmem:[#allocation10] sm:$0xff] %v1410
    %s1428 = sshllo.u32 0, 2
    %v1430 = vld [vmem:[#allocation7] sm:%s1428]
    %s1431 = sshllo.u32 0, 2
    %1432 = vst [vmem:[#allocation8] sm:%s1431] %v1430
    %s1434 = sshllo.u32 0, 2
    %v1436 = vld [vmem:[#allocation10] sm:%s1434]
    %s1437 = sshllo.u32 0, 2
    %1438 = vst [vmem:[#allocation11] sm:%s1437] %v1436
    %s1440 = ssub.s32 32, 32
    %1441 = vsyncadd [#allocation9], %s1440
    %s1443 = sshll.u32 [#allocation8], 4
    %s1444 = int_to_ptr.vmem [resolvable:$true] %s1443
    %1446 = dma.vmem_to_hbm [thread:$0]  %s1444, 32, %s1, [#allocation9]
    // Predicated region
    $region40: #{custom-call} parent=1 // pred_check
      _
    $region41: #{custom-call} parent=1 // pred_check_branch
      %1448 = sbr.rel (0) target = $region43
    $region42: #{custom-call} parent=1 // pred_region
      // Predicated region
      $region44: #{custom-call} parent=42 // pred_check
        _
      $region45: #{custom-call} parent=42 // pred_check_branch
        %1450 = sbr.rel target = $region47
      $region46: #{custom-call} parent=42 // pred_region
        // Predicated region
        $region59: #{custom-call} parent=46 // pred_check
          _
        $region60: #{custom-call} parent=46 // pred_check_branch
          %1465 = sbr.rel (0) target = $region62
        $region61: #{custom-call} parent=46 // pred_region
          loop: start=0, step=1, limit=1
          $region63: #{custom-call} parent=61 // loop_pre_header
            _
          $region64: #{custom-call} parent=61 // loop_header
            %s1468 = sphi 0, %s1472
            %p1469 = scmp.ge.s32.totalorder %s1468, 1
            %s1473 = sphi [#allocation11], [#allocation11]
            %s1474 = sphi %s2, %s2
          $region65: #{custom-call} parent=61 // loop_header_branch
            %1471 = sbr.rel (%p1469) target = $region69
          $region66: #{custom-call} parent=61 // loop_body
            %v1475 = vld [vmem:[%s1473] sm:$0x3]
            %1476 = vst [vmem:[%s1474] sm:$0x3] %v1475
          $region67: #{custom-call} parent=61 // loop_footer
            %s1472 = sadd.s32 1, %s1468
          $region68: #{custom-call} parent=61 // loop_footer_branch
            %1467 = sbr.rel target = $region64
          $region69: #{custom-call} parent=61 // loop_exit
            _
        $region62: #{custom-call} parent=46 // pred_fallthru
          _
      $region47: #{custom-call} parent=42 // pred_fallthru
        _
      // Predicated region
      $region48: #{custom-call} parent=42 // pred_check
        _
      $region49: #{custom-call} parent=42 // pred_check_branch
        %1452 = sbr.rel (0) target = $region51
      $region50: #{custom-call} parent=42 // pred_region
        loop: start=0, step=1, limit=1
        $region52: #{custom-call} parent=50 // loop_pre_header
          _
        $region53: #{custom-call} parent=50 // loop_header
          %s1455 = sphi 0, %s1459
          %p1456 = scmp.ge.s32.totalorder %s1455, 1
          %s1460 = sphi [#allocation11], [#allocation11]
          %s1461 = sphi %s2, %s2
        $region54: #{custom-call} parent=50 // loop_header_branch
          %1458 = sbr.rel (%p1456) target = $region58
        $region55: #{custom-call} parent=50 // loop_body
          %v1462 = vld [vmem:[%s1460] sm:$0x3]
          %1463 = vst [vmem:[%s1461] sm:$0x3] %v1462
        $region56: #{custom-call} parent=50 // loop_footer
          %s1459 = sadd.s32 1, %s1455
        $region57: #{custom-call} parent=50 // loop_footer_branch
          %1454 = sbr.rel target = $region53
        $region58: #{custom-call} parent=50 // loop_exit
          _
      $region51: #{custom-call} parent=42 // pred_fallthru
        _
    $region43: #{custom-call} parent=1 // pred_fallthru
      _
    %1477 = vnop
    %1478 = dma.done [#allocation9], 32
    %1479 = vsyncpa [#allocation9], 1

// kernel: _lambda_.1
$region0: #{_lambda_.1}
  #allocation0 [shape = 'u32[]', space=smem, size = 0x4, offset = 0x4, fixed_abs, tag = 'smem constant byte address 0x4 - core index']
  #allocation1 [shape = 'u32[144,128]{1,0:T(1,128)}', space=vmem, size = 0x12000, scoped, tag = 'internal scratch']
  %s0 = inlined_call_operand.vmem [shape: bf16[2,16,192], index: 0, kind: input, shape index: {}]
  %s1 = inlined_call_operand.vmem [shape: bf16[192,128], index: 1, kind: input, shape index: {}]
  %s2 = inlined_call_operand.vmem [shape: f32[1,128], index: 2, kind: input, shape index: {}]
  %s3 = inlined_call_operand.vmem [shape: bf16[128,128], index: 3, kind: input, shape index: {}]
  %s4 = inlined_call_operand.vmem [shape: f32[1,128], index: 4, kind: input, shape index: {}]
  %s5 = inlined_call_operand.vmem [shape: f32[2,1,128], index: 5, kind: input, shape index: {}]
  %s6 = inlined_call_operand.vmem [shape: f32[2,16,128], index: 6, kind: output, shape index: {}]
  %s7 = sld [smem:[#allocation0]]
  $region57: #{_lambda_.1} parent=0
    _
  %s9 = ssub.s32 1, %s7
  %s10 = scalar_select 0, %s9, %s7
  loop: start=0, step=1, limit=4
  $region2: #{_lambda_.1} parent=0 // loop_pre_header
    _
  $region3: #{_lambda_.1} parent=0 // loop_header
    %s12 = sphi 0, %s16
    %p13 = scmp.ge.s32.totalorder %s12, 4
    %s22 = sphi 0, %s24
    %s25 = sphi 0, %s22
    %s26 = sphi 0, %s25
    %s42 = sphi 0, %s26
    %s46 = sphi 0, %s46
    %s48 = sphi 0, %s46
    %s49 = sphi 0, %s48
    %s63 = sphi 0, %s49
    %s67 = sphi 0, %s67
    %s69 = sphi 0, %s67
    %s70 = sphi 0, %s69
    %s84 = sphi 0, %s70
    %s88 = sphi 0, %s88
    %s90 = sphi 0, %s88
    %s91 = sphi 0, %s90
    %s105 = sphi 0, %s91
    %s109 = sphi 0, %s109
    %s111 = sphi 0, %s109
    %s112 = sphi 0, %s111
    %s126 = sphi 0, %s112
    %s132 = sphi 0, %s134
    %s135 = sphi 0, %s132
    %s136 = sphi 0, %s135
    %s152 = sphi 0, %s136
    %s158 = sphi 0, %s160
    %s161 = sphi 0, %s158
    %s162 = sphi 0, %s161
    %s178 = sphi 0, %s162
  $region4: #{_lambda_.1} parent=0 // loop_header_branch
    %15 = sbr.rel (%p13) target = $region8
  $region5: #{_lambda_.1} parent=0 // loop_body
    %s17 = ssub.s32 %s12, 1
    %s18 = ssub.s32 %s12, 2
    %s19 = sadd.s32 %s12, 1
    %s20 = ssub.s32 %s12, %s19
    %p21 = scmp.eq.s32.totalorder %s20, 0
    %s23 = sadd.s32 %s22, 1
    %s24 = scalar_select %p21, %s22, %s23
    %p27 = pneg %p21
    %p28 = scmp.eq.s32.totalorder %s12, 1
    %p29 = por %p27, %p28
    %p30 = scmp.ne.s32.totalorder %s22, %s25
    %p31 = scmp.eq.s32.totalorder %s12, 0
    %p32 = por %p30, %p31
    %p33 = scmp.ne.s32.totalorder %s22, %s25
    %p34 = scmp.eq.s32.totalorder %s17, 1
    %p35 = por %p33, %p34
    %p36 = scmp.ne.s32.totalorder %s25, %s26
    %p37 = scmp.eq.s32.totalorder %s17, 0
    %p38 = por %p36, %p37
    %p39 = scmp.ne.s32.totalorder %s25, %s26
    %p40 = scmp.eq.s32.totalorder %s18, 1
    %p41 = por %p39, %p40
    %p43 = scmp.ne.s32.totalorder %s26, %s42
    %p44 = scmp.eq.s32.totalorder %s18, 0
    %p45 = por %p43, %p44
    %s47 = sadd.s32 %s46, 1
    %p50 = scmp.eq.s32.totalorder %s12, 1
    %p51 = scmp.ne.s32.totalorder %s46, %s48
    %p52 = scmp.eq.s32.totalorder %s12, 0
    %p53 = por %p51, %p52
    %p54 = scmp.ne.s32.totalorder %s46, %s48
    %p55 = scmp.eq.s32.totalorder %s17, 1
    %p56 = por %p54, %p55
    %p57 = scmp.ne.s32.totalorder %s48, %s49
    %p58 = scmp.eq.s32.totalorder %s17, 0
    %p59 = por %p57, %p58
    %p60 = scmp.ne.s32.totalorder %s48, %s49
    %p61 = scmp.eq.s32.totalorder %s18, 1
    %p62 = por %p60, %p61
    %p64 = scmp.ne.s32.totalorder %s49, %s63
    %p65 = scmp.eq.s32.totalorder %s18, 0
    %p66 = por %p64, %p65
    %s68 = sadd.s32 %s67, 1
    %p71 = scmp.eq.s32.totalorder %s12, 1
    %p72 = scmp.ne.s32.totalorder %s67, %s69
    %p73 = scmp.eq.s32.totalorder %s12, 0
    %p74 = por %p72, %p73
    %p75 = scmp.ne.s32.totalorder %s67, %s69
    %p76 = scmp.eq.s32.totalorder %s17, 1
    %p77 = por %p75, %p76
    %p78 = scmp.ne.s32.totalorder %s69, %s70
    %p79 = scmp.eq.s32.totalorder %s17, 0
    %p80 = por %p78, %p79
    %p81 = scmp.ne.s32.totalorder %s69, %s70
    %p82 = scmp.eq.s32.totalorder %s18, 1
    %p83 = por %p81, %p82
    %p85 = scmp.ne.s32.totalorder %s70, %s84
    %p86 = scmp.eq.s32.totalorder %s18, 0
    %p87 = por %p85, %p86
    %s89 = sadd.s32 %s88, 1
    %p92 = scmp.eq.s32.totalorder %s12, 1
    %p93 = scmp.ne.s32.totalorder %s88, %s90
    %p94 = scmp.eq.s32.totalorder %s12, 0
    %p95 = por %p93, %p94
    %p96 = scmp.ne.s32.totalorder %s88, %s90
    %p97 = scmp.eq.s32.totalorder %s17, 1
    %p98 = por %p96, %p97
    %p99 = scmp.ne.s32.totalorder %s90, %s91
    %p100 = scmp.eq.s32.totalorder %s17, 0
    %p101 = por %p99, %p100
    %p102 = scmp.ne.s32.totalorder %s90, %s91
    %p103 = scmp.eq.s32.totalorder %s18, 1
    %p104 = por %p102, %p103
    %p106 = scmp.ne.s32.totalorder %s91, %s105
    %p107 = scmp.eq.s32.totalorder %s18, 0
    %p108 = por %p106, %p107
    %s110 = sadd.s32 %s109, 1
    %p113 = scmp.eq.s32.totalorder %s12, 1
    %p114 = scmp.ne.s32.totalorder %s109, %s111
    %p115 = scmp.eq.s32.totalorder %s12, 0
    %p116 = por %p114, %p115
    %p117 = scmp.ne.s32.totalorder %s109, %s111
    %p118 = scmp.eq.s32.totalorder %s17, 1
    %p119 = por %p117, %p118
    %p120 = scmp.ne.s32.totalorder %s111, %s112
    %p121 = scmp.eq.s32.totalorder %s17, 0
    %p122 = por %p120, %p121
    %p123 = scmp.ne.s32.totalorder %s111, %s112
    %p124 = scmp.eq.s32.totalorder %s18, 1
    %p125 = por %p123, %p124
    %p127 = scmp.ne.s32.totalorder %s112, %s126
    %p128 = scmp.eq.s32.totalorder %s18, 0
    %p129 = por %p127, %p128
    %s130 = ssub.s32 %s12, %s19
    %p131 = scmp.eq.s32.totalorder %s130, 0
    %s133 = sadd.s32 %s132, 1
    %s134 = scalar_select %p131, %s132, %s133
    %p137 = pneg %p131
    %p138 = scmp.eq.s32.totalorder %s12, 1
    %p139 = por %p137, %p138
    %p140 = scmp.ne.s32.totalorder %s132, %s135
    %p141 = scmp.eq.s32.totalorder %s12, 0
    %p142 = por %p140, %p141
    %p143 = scmp.ne.s32.totalorder %s132, %s135
    %p144 = scmp.eq.s32.totalorder %s17, 1
    %p145 = por %p143, %p144
    %p146 = scmp.ne.s32.totalorder %s135, %s136
    %p147 = scmp.eq.s32.totalorder %s17, 0
    %p148 = por %p146, %p147
    %p149 = scmp.ne.s32.totalorder %s135, %s136
    %p150 = scmp.eq.s32.totalorder %s18, 1
    %p151 = por %p149, %p150
    %p153 = scmp.ne.s32.totalorder %s136, %s152
    %p154 = scmp.eq.s32.totalorder %s18, 0
    %p155 = por %p153, %p154
    %s156 = ssub.s32 %s12, %s19
    %p157 = scmp.eq.s32.totalorder %s156, 0
    %s159 = sadd.s32 %s158, 1
    %s160 = scalar_select %p157, %s158, %s159
    %p163 = pneg %p157
    %p164 = scmp.eq.s32.totalorder %s12, 1
    %p165 = por %p163, %p164
    %p166 = scmp.ne.s32.totalorder %s158, %s161
    %p167 = scmp.eq.s32.totalorder %s12, 0
    %p168 = por %p166, %p167
    %p169 = scmp.ne.s32.totalorder %s158, %s161
    %p170 = scmp.eq.s32.totalorder %s17, 1
    %p171 = por %p169, %p170
    %p172 = scmp.ne.s32.totalorder %s161, %s162
    %p173 = scmp.eq.s32.totalorder %s17, 0
    %p174 = por %p172, %p173
    %p175 = scmp.ne.s32.totalorder %s161, %s162
    %p176 = scmp.eq.s32.totalorder %s18, 1
    %p177 = por %p175, %p176
    %p179 = scmp.ne.s32.totalorder %s162, %s178
    %p180 = scmp.eq.s32.totalorder %s18, 0
    %p181 = por %p179, %p180
    %p182 = scmp.le.s32.totalorder 1, %s12
    %p183 = scmp.lt.s32.totalorder %s12, 3
    %p184 = pnand %p182, %p183
    %p185 = pneg %p184
    // Predicated region
    $region9: #{_lambda_.1} parent=5 // pred_check
      _
    $region10: #{_lambda_.1} parent=5 // pred_check_branch
      %187 = sbr.rel (%p184) target = $region12
    $region11: #{_lambda_.1} parent=5 // pred_region
      %s188 = ssub.s32 %s12, 1
      // Predicated region
      $region13: #{_lambda_.1} parent=11 // pred_check
        %p189 = pneg %p59
      $region14: #{_lambda_.1} parent=11 // pred_check_branch
        %191 = sbr.rel (%p189) target = $region16
      $region15: #{_lambda_.1} parent=11 // pred_region
        _
      $region16: #{_lambda_.1} parent=11 // pred_fallthru
        _
      // Predicated region
      $region17: #{_lambda_.1} parent=11 // pred_check
        %p192 = pneg %p80
      $region18: #{_lambda_.1} parent=11 // pred_check_branch
        %194 = sbr.rel (%p192) target = $region20
      $region19: #{_lambda_.1} parent=11 // pred_region
        _
      $region20: #{_lambda_.1} parent=11 // pred_fallthru
        _
      // Predicated region
      $region21: #{_lambda_.1} parent=11 // pred_check
        %p195 = pneg %p101
      $region22: #{_lambda_.1} parent=11 // pred_check_branch
        %197 = sbr.rel (%p195) target = $region24
      $region23: #{_lambda_.1} parent=11 // pred_region
        _
      $region24: #{_lambda_.1} parent=11 // pred_fallthru
        _
      // Predicated region
      $region25: #{_lambda_.1} parent=11 // pred_check
        %p198 = pneg %p122
      $region26: #{_lambda_.1} parent=11 // pred_check_branch
        %200 = sbr.rel (%p198) target = $region28
      $region27: #{_lambda_.1} parent=11 // pred_region
        _
      $region28: #{_lambda_.1} parent=11 // pred_fallthru
        _
    $region12: #{_lambda_.1} parent=5 // pred_fallthru
      _
    %p201 = scmp.lt.s32.totalorder %s12, 2
    // Predicated region
    $region29: #{_lambda_.1} parent=5 // pred_check
      %p202 = pneg %p201
    $region30: #{_lambda_.1} parent=5 // pred_check_branch
      %204 = sbr.rel (%p202) target = $region32
    $region31: #{_lambda_.1} parent=5 // pred_region
      // Predicated region
      $region33: #{_lambda_.1} parent=31 // pred_check
        %p205 = pneg %p32
      $region34: #{_lambda_.1} parent=31 // pred_check_branch
        %207 = sbr.rel (%p205) target = $region36
      $region35: #{_lambda_.1} parent=31 // pred_region
        %p208 = scmp.lt.s32.totalorder %s12, 1
        %s209 = scalar_select %p208, %s12, 1
        %s210 = smul.addr %s209, 4
        %s211 = smul.addr %s210, 4
        %s212 = scalar_lea.vmem %s0, %s211
      $region36: #{_lambda_.1} parent=31 // pred_fallthru
        _
      // Predicated region
      $region37: #{_lambda_.1} parent=31 // pred_check
        %p213 = pneg %p142
      $region38: #{_lambda_.1} parent=31 // pred_check_branch
        %215 = sbr.rel (%p213) target = $region40
      $region39: #{_lambda_.1} parent=31 // pred_region
        %p216 = scmp.lt.s32.totalorder %s12, 1
        %s217 = scalar_select %p216, %s12, 1
        %s218 = scalar_lea.vmem %s5, %s217
      $region40: #{_lambda_.1} parent=31 // pred_fallthru
        _
    $region32: #{_lambda_.1} parent=5 // pred_fallthru
      _
    %p219 = scmp.le.s32.totalorder 1, %s12
    %p220 = scmp.lt.s32.totalorder %s12, 3
    %p221 = pnand %p219, %p220
    %p222 = pneg %p221
    // Predicated region
    $region41: #{_lambda_.1} parent=5 // pred_check
      _
    $region42: #{_lambda_.1} parent=5 // pred_check_branch
      %224 = sbr.rel (%p221) target = $region44
    $region43: #{_lambda_.1} parent=5 // pred_region
      %s225 = ssub.s32 %s12, 1
      %p226 = scmp.lt.s32.totalorder %s17, 1
      %s227 = scalar_select %p226, %s17, 1
      %s228 = smul.addr %s227, 4
      %s229 = smul.addr %s228, 4
      %s230 = scalar_lea.vmem %s0, %s229
      %p231 = pneg %p38
      %p232 = pneg %p35
      %p233 = pneg %p59
      %p234 = pneg %p56
      %p235 = pneg %p80
      %p236 = pneg %p77
      %p237 = pneg %p101
      %p238 = pneg %p98
      %p239 = pneg %p122
      %p240 = pneg %p119
      %p241 = scmp.lt.s32.totalorder %s17, 1
      %s242 = scalar_select %p241, %s17, 1
      %s243 = scalar_lea.vmem %s5, %s242
      %p244 = pneg %p148
      %p245 = pneg %p145
      %p246 = pneg %p174
      %p247 = pneg %p171
      %p248 = scmp.lt.s32.totalorder %s17, 1
      %s249 = scalar_select %p248, %s17, 1
      %s250 = smul.addr %s249, 2
      %s251 = smul.addr %s250, 8
      %s252 = scalar_lea.vmem %s6, %s251
      %p253 = scmp.lt.s32.totalorder %s17, 1
      %s254 = scalar_select %p253, %s17, 1
      %s255 = smul.addr %s254, 4
      %s256 = smul.addr %s255, 4
      %s257 = scalar_lea.vmem %s0, %s256
      %p258 = scmp.lt.s32.totalorder %s17, 1
      %s259 = scalar_select %p258, %s17, 1
      %s260 = scalar_lea.vmem %s5, %s259
      %p261 = scmp.lt.s32.totalorder %s17, 1
      %s262 = scalar_select %p261, %s17, 1
      %s263 = smul.addr %s262, 2
      %s264 = smul.addr %s263, 8
      %s265 = scalar_lea.vmem %s6, %s264
      %v267 = vld [vmem:[%s257] sm:$0xff]
      %v268 = vld [vmem:[%s257 + $0x8] sm:$0xff]
      %v269 = vld [vmem:[%s1] sm:$0xf]
      %v270 = vld [vmem:[%s1 + $0x4] sm:$0xf]
      %v271 = vld [vmem:[%s1 + $0x8] sm:$0xf]
      %v272 = vld [vmem:[%s1 + $0xc] sm:$0xf]
      %v273 = vld [vmem:[%s1 + $0x10] sm:$0xf]
      %v274 = vld [vmem:[%s1 + $0x14] sm:$0xf]
      %v275 = vld [vmem:[%s1 + $0x18] sm:$0xf]
      %v276 = vld [vmem:[%s1 + $0x1c] sm:$0xf]
      %v277 = vld [vmem:[%s1 + $0x20] sm:$0xf]
      %v278 = vld [vmem:[%s1 + $0x24] sm:$0xf]
      %v279 = vld [vmem:[%s1 + $0x28] sm:$0xf]
      %v280 = vld [vmem:[%s1 + $0x2c] sm:$0xf]
      %v281 = vld [vmem:[%s1 + $0x30] sm:$0xf]
      %v282 = vld [vmem:[%s1 + $0x34] sm:$0xf]
      %v283 = vld [vmem:[%s1 + $0x38] sm:$0xf]
      %v284 = vld [vmem:[%s1 + $0x3c] sm:$0xf]
      %v285 = vld [vmem:[%s1 + $0x40] sm:$0xf]
      %v286 = vld [vmem:[%s1 + $0x44] sm:$0xf]
      %v287 = vld [vmem:[%s1 + $0x48] sm:$0xf]
      %v288 = vld [vmem:[%s1 + $0x4c] sm:$0xf]
      %v289 = vld [vmem:[%s1 + $0x50] sm:$0xf]
      %v290 = vld [vmem:[%s1 + $0x54] sm:$0xf]
      %v291 = vld [vmem:[%s1 + $0x58] sm:$0xf]
      %v292 = vld [vmem:[%s1 + $0x5c] sm:$0xf]
      %v293 = vld [vmem:[%s2] sm:$0x1]
      %v295 = vlaneseq
      %v296 = vshrl.u32 %v295, 7
      %v297 = vsub.s32 0, %v296
      %v298 = vrot.slane %v293, %v297
      %v302 = vunpack.c.l.b16 %v267
      %v303 = vunpack.c.h.b16 %v267
      %v304 = vunpack.c.l.b16 %v268
      %v305 = vunpack.c.h.b16 %v268
      %v306 = vpack.c.b16 %v304, %v302
      %v307 = vpack.c.b16 %v305, %v303
      %v333 = vunpack.c.l.b16 %v269
      %v334 = vunpack.c.l.b16 %v270
      %v335 = vunpack.c.l.b16 %v271
      %v336 = vunpack.c.l.b16 %v272
      %v337 = vunpack.c.l.b16 %v273
      %v338 = vunpack.c.l.b16 %v274
      %v339 = vunpack.c.l.b16 %v275
      %v340 = vunpack.c.l.b16 %v276
      %v341 = vunpack.c.l.b16 %v277
      %v342 = vunpack.c.l.b16 %v278
      %v343 = vunpack.c.l.b16 %v279
      %v344 = vunpack.c.l.b16 %v280
      %v345 = vunpack.c.l.b16 %v281
      %v346 = vunpack.c.l.b16 %v282
      %v347 = vunpack.c.l.b16 %v283
      %v348 = vunpack.c.l.b16 %v284
      %v349 = vunpack.c.l.b16 %v285
      %v350 = vunpack.c.l.b16 %v286
      %v351 = vunpack.c.l.b16 %v287
      %v352 = vunpack.c.l.b16 %v288
      %v353 = vunpack.c.l.b16 %v289
      %v354 = vunpack.c.l.b16 %v290
      %v355 = vunpack.c.l.b16 %v291
      %v356 = vunpack.c.l.b16 %v292
      %v357 = vpack.c.b16 %v334, %v333
      %v358 = vpack.c.b16 %v336, %v335
      %v359 = vpack.c.b16 %v338, %v337
      %v360 = vpack.c.b16 %v340, %v339
      %v361 = vpack.c.b16 %v342, %v341
      %v362 = vpack.c.b16 %v344, %v343
      %v363 = vpack.c.b16 %v346, %v345
      %v364 = vpack.c.b16 %v348, %v347
      %v365 = vpack.c.b16 %v350, %v349
      %v366 = vpack.c.b16 %v352, %v351
      %v367 = vpack.c.b16 %v354, %v353
      %v368 = vpack.c.b16 %v356, %v355
      %vm381 = vcmask 523264
      %v383 = vsel %vm381, %v307, 0
      %385 = vmatprep.subr.bf16.mxu0 0
      %386 = vmatpush1.bf16.msra.mxu0 %v357
      %387 = vmatprep.subr.bf16.mxu0 0
      %388 = vmatpush1.bf16.msra.mxu0 %v358
      %389 = vmatprep.subr.bf16.mxu0 0
      %390 = vmatpush1.bf16.msra.mxu0 %v359
      %391 = vmatprep.subr.bf16.mxu0 0
      %392 = vmatpush1.bf16.msra.mxu0 %v360
      %393 = vmatprep.subr.bf16.mxu0 0
      %394 = vmatpush1.bf16.msra.mxu0 %v361
      %395 = vmatprep.subr.bf16.mxu0 0
      %396 = vmatpush1.bf16.msra.mxu0 %v362
      %397 = vmatprep.subr.bf16.mxu0 0
      %398 = vmatpush1.bf16.msra.mxu0 %v363
      %399 = vmatprep.subr.bf16.mxu0 0
      %400 = vmatpush1.bf16.msra.mxu0 %v364
      %401 = vmatprep.subr.bf16.mxu0 0
      %402 = vmatpush1.bf16.msra.mxu0 %v365
      %403 = vmatprep.subr.bf16.mxu0 0
      %404 = vmatpush1.bf16.msra.mxu0 %v366
      %405 = vmatprep.subr.bf16.mxu0 0
      %406 = vmatpush1.bf16.msra.mxu0 %v367
      %407 = vmatprep.subr.bf16.mxu0 0
      %408 = vmatpush1.bf16.msra.mxu0 %v368
      %409 = vmatprep.subr.bf16.mxu0 0
      %410 = vmatpush1.bf16.msra.mxu0 0
      %411 = vmatprep.subr.bf16.mxu0 0
      %412 = vmatpush1.bf16.msra.mxu0 0
      %413 = vmatprep.subr.bf16.mxu0 0
      %414 = vmatpush1.bf16.msra.mxu0 0
      %415 = vmatprep.subr.bf16.mxu0 0
      %416 = vmatpush1.bf16.msra.mxu0 0
      %417 = vmatprep.mubr.bf16.mxu0 %v383
      %418 = vmatmul.mubr.bf16.gmra.mrb[0].mxu0 %v306
      %v419 = vpop.f32.mrb[0].mxu0
      %v420 = vadd.f32 %v298, %v419
      %v421 = vpop.f32.mrb[0].mxu0
      %v422 = vpop.f32.mrb[0].mxu0
      %v423 = vadd.f32 %v298, %v422
      %v424 = vpop.f32.mrb[0].mxu0
      %425 = vdwg.mxu0
      %v426 = vmax.f32 %v420, 0.0
      %v427 = vmax.f32 %v423, 0.0
      %v428 = vpack.c.bf16 %v427, %v426
      %v429 = vld [vmem:[%s3] sm:$0xf]
      %v430 = vld [vmem:[%s3 + $0x4] sm:$0xf]
      %v431 = vld [vmem:[%s3 + $0x8] sm:$0xf]
      %v432 = vld [vmem:[%s3 + $0xc] sm:$0xf]
      %v433 = vld [vmem:[%s3 + $0x10] sm:$0xf]
      %v434 = vld [vmem:[%s3 + $0x14] sm:$0xf]
      %v435 = vld [vmem:[%s3 + $0x18] sm:$0xf]
      %v436 = vld [vmem:[%s3 + $0x1c] sm:$0xf]
      %v437 = vld [vmem:[%s3 + $0x20] sm:$0xf]
      %v438 = vld [vmem:[%s3 + $0x24] sm:$0xf]
      %v439 = vld [vmem:[%s3 + $0x28] sm:$0xf]
      %v440 = vld [vmem:[%s3 + $0x2c] sm:$0xf]
      %v441 = vld [vmem:[%s3 + $0x30] sm:$0xf]
      %v442 = vld [vmem:[%s3 + $0x34] sm:$0xf]
      %v443 = vld [vmem:[%s3 + $0x38] sm:$0xf]
      %v444 = vld [vmem:[%s3 + $0x3c] sm:$0xf]
      %v445 = vld [vmem:[%s4] sm:$0x1]
      %v447 = vlaneseq
      %v448 = vshrl.u32 %v447, 7
      %v449 = vsub.s32 0, %v448
      %v450 = vrot.slane %v445, %v449
      %v468 = vunpack.c.l.b16 %v429
      %v469 = vunpack.c.l.b16 %v430
      %v470 = vunpack.c.l.b16 %v431
      %v471 = vunpack.c.l.b16 %v432
      %v472 = vunpack.c.l.b16 %v433
      %v473 = vunpack.c.l.b16 %v434
      %v474 = vunpack.c.l.b16 %v435
      %v475 = vunpack.c.l.b16 %v436
      %v476 = vunpack.c.l.b16 %v437
      %v477 = vunpack.c.l.b16 %v438
      %v478 = vunpack.c.l.b16 %v439
      %v479 = vunpack.c.l.b16 %v440
      %v480 = vunpack.c.l.b16 %v441
      %v481 = vunpack.c.l.b16 %v442
      %v482 = vunpack.c.l.b16 %v443
      %v483 = vunpack.c.l.b16 %v444
      %v484 = vpack.c.b16 %v469, %v468
      %v485 = vpack.c.b16 %v471, %v470
      %v486 = vpack.c.b16 %v473, %v472
      %v487 = vpack.c.b16 %v475, %v474
      %v488 = vpack.c.b16 %v477, %v476
      %v489 = vpack.c.b16 %v479, %v478
      %v490 = vpack.c.b16 %v481, %v480
      %v491 = vpack.c.b16 %v483, %v482
      %500 = vmatprep.subr.bf16.mxu0 0
      %501 = vmatpush1.bf16.msra.mxu0 %v484
      %502 = vmatprep.subr.bf16.mxu0 0
      %503 = vmatpush1.bf16.msra.mxu0 %v485
      %504 = vmatprep.subr.bf16.mxu0 0
      %505 = vmatpush1.bf16.msra.mxu0 %v486
      %506 = vmatprep.subr.bf16.mxu0 0
      %507 = vmatpush1.bf16.msra.mxu0 %v487
      %508 = vmatprep.subr.bf16.mxu0 0
      %509 = vmatpush1.bf16.msra.mxu0 %v488
      %510 = vmatprep.subr.bf16.mxu0 0
      %511 = vmatpush1.bf16.msra.mxu0 %v489
      %512 = vmatprep.subr.bf16.mxu0 0
      %513 = vmatpush1.bf16.msra.mxu0 %v490
      %514 = vmatprep.subr.bf16.mxu0 0
      %515 = vmatpush1.bf16.msra.mxu0 %v491
      %516 = vmatprep.subr.bf16.mxu0 0
      %517 = vmatpush1.bf16.msra.mxu0 0
      %518 = vmatprep.subr.bf16.mxu0 0
      %519 = vmatpush1.bf16.msra.mxu0 0
      %520 = vmatprep.subr.bf16.mxu0 0
      %521 = vmatpush1.bf16.msra.mxu0 0
      %522 = vmatprep.subr.bf16.mxu0 0
      %523 = vmatpush1.bf16.msra.mxu0 0
      %524 = vmatprep.subr.bf16.mxu0 0
      %525 = vmatpush1.bf16.msra.mxu0 0
      %526 = vmatprep.subr.bf16.mxu0 0
      %527 = vmatpush1.bf16.msra.mxu0 0
      %528 = vmatprep.subr.bf16.mxu0 0
      %529 = vmatpush1.bf16.msra.mxu0 0
      %530 = vmatprep.subr.bf16.mxu0 0
      %531 = vmatpush1.bf16.msra.mxu0 0
      %532 = vmatprep.mubr.bf16.mxu0 0
      %533 = vmatmul.mubr.bf16.gmra.mrb[0].mxu0 %v428
      %v534 = vpop.f32.mrb[0].mxu0
      %v535 = vadd.f32 %v450, %v534
      %v536 = vpop.f32.mrb[0].mxu0
      %v537 = vpop.f32.mrb[0].mxu0
      %v538 = vadd.f32 %v450, %v537
      %v539 = vpop.f32.mrb[0].mxu0
      %540 = vdwg.mxu0
      %v541 = vxor.u32 %v535, 2147483648
      %v542 = vxor.u32 %v538, 2147483648
      %v543 = vmul.f32 %v541, 1.442695
      %v544 = vpow.pop %v543
      %v545 = vmul.f32 %v542, 1.442695
      %v546 = vpow.pop %v545
      %v547 = vadd.f32 %v544, 1.0
      %v548 = vadd.f32 %v546, 1.0
      %v549 = vrcp.pop %v547
      %v550 = vmul.f32 1.0, %v549
      %v551 = vrcp.pop %v548
      %v552 = vmul.f32 1.0, %v551
      %v553 = vmul.f32 %v550, 0.5
      %v554 = vmul.f32 %v552, 0.5
      %557 = vrot.lane.b32.xlu0 %v553, 126
      %v558 = vpop.permute.xlu0 %557
      %559 = vrot.lane.b32.xlu0 %v554, 126
      %v560 = vpop.permute.xlu0 %559
      %v563 = vsub.f32 %v550, %v558
      %v564 = vsub.f32 %v552, %v560
      %v565 = vadd.f32 %v550, %v558
      %v566 = vadd.f32 %v552, %v560
      %569 = vrot.lane.b32.xlu0 %v563, 4
      %v570 = vpop.permute.xlu0 %569
      %571 = vrot.lane.b32.xlu0 %v564, 4
      %v572 = vpop.permute.xlu0 %571
      %577 = vrot.lane.b32.xlu0 %v565, 6
      %v578 = vpop.permute.xlu0 %577
      %579 = vrot.lane.b32.xlu0 %v566, 6
      %v580 = vpop.permute.xlu0 %579
      %vm583 = vcmask 15360
      %v584 = vsel %vm583, %v570, %v578
      %v585 = vsel %vm583, %v572, %v580
      %588 = vrot.lane.b32.xlu0 %v584, 124
      %v589 = vpop.permute.xlu0 %588
      %590 = vrot.lane.b32.xlu0 %v585, 124
      %v591 = vpop.permute.xlu0 %590
      %vm594 = vcmask 1014784
      %v595 = vsel %vm594, %v550, %v589
      %v596 = vsel %vm594, %v552, %v591
      %v597 = vld [vmem:[%s260] sm:$0x1]
      %v599 = vlaneseq
      %v600 = vshrl.u32 %v599, 7
      %v601 = vsub.s32 0, %v600
      %v602 = vrot.slane %v597, %v601
      %v604 = vmul.f32 %v595, %v602
      %v605 = vmul.f32 %v596, %v602
      %606 = vst [vmem:[%s265] sm:$0xff] %v604
      %607 = vst [vmem:[%s265 + $0x8] sm:$0xff] %v605
      %p608 = scmp.lt.s32.totalorder %s17, 1
      %s609 = scalar_select %p608, %s17, 1
      %s610 = smul.addr %s609, 2
      %s611 = smul.addr %s610, 8
      %s612 = scalar_lea.vmem %s6, %s611
      // Predicated region
      $region45: #{_lambda_.1} parent=43 // pred_check
        %p613 = pneg %p171
      $region46: #{_lambda_.1} parent=43 // pred_check_branch
        %615 = sbr.rel (%p613) target = $region48
      $region47: #{_lambda_.1} parent=43 // pred_region
        _
      $region48: #{_lambda_.1} parent=43 // pred_fallthru
        _
    $region44: #{_lambda_.1} parent=5 // pred_fallthru
      _
    %p616 = scmp.le.s32.totalorder 2, %s12
    // Predicated region
    $region49: #{_lambda_.1} parent=5 // pred_check
      %p617 = pneg %p616
    $region50: #{_lambda_.1} parent=5 // pred_check_branch
      %619 = sbr.rel (%p617) target = $region52
    $region51: #{_lambda_.1} parent=5 // pred_region
      %s620 = ssub.s32 %s12, 2
      // Predicated region
      $region53: #{_lambda_.1} parent=51 // pred_check
        %p621 = pneg %p177
      $region54: #{_lambda_.1} parent=51 // pred_check_branch
        %623 = sbr.rel (%p621) target = $region56
      $region55: #{_lambda_.1} parent=51 // pred_region
        %p624 = scmp.lt.s32.totalorder %s18, 1
        %s625 = scalar_select %p624, %s18, 1
        %s626 = smul.addr %s625, 2
        %s627 = smul.addr %s626, 8
        %s628 = scalar_lea.vmem %s6, %s627
      $region56: #{_lambda_.1} parent=51 // pred_fallthru
        _
    $region52: #{_lambda_.1} parent=5 // pred_fallthru
      _
  $region6: #{_lambda_.1} parent=0 // loop_footer
    %s16 = sadd.s32 1, %s12
  $region7: #{_lambda_.1} parent=0 // loop_footer_branch
    %11 = sbr.rel target = $region3
  $region8: #{_lambda_.1} parent=0 // loop_exit
    _

</llo_original>
